<compile_context>
chip_gen: v5e
topology: v5e:2x2
jax: 0.10.0
libtpu: 0.0.40
codegen_flags: <defaults>
</compile_context>

<pallas_src>
import numpy as np
import jax
import jax.numpy as jnp
from jax.experimental import pallas as pl
from jax.experimental.pallas import tpu as pltpu


def _round_up(x, m):
    return ((x + m - 1) // m) * m


def _choose_tile_m(M, tile_m):
    """Pick an effective tile_m (multiple of 8) and the padded M."""
    tile_m = _round_up(max(8, min(tile_m, _round_up(M, 8))), 8)
    n_tiles = (M + tile_m - 1) // tile_m
    if n_tiles == 1 and M >= 16:
        # Give v7x's second TensorCore a tile (grid sharded via
        # dimension_semantics=("parallel",)); the extra ~0.35us step is noise.
        tile_m = _round_up((M + 1) // 2, 8)
        n_tiles = (M + tile_m - 1) // tile_m
    return tile_m, n_tiles * tile_m


def _block_diag(mats):
    rows = sum(m.shape[0] for m in mats)
    cols = sum(m.shape[1] for m in mats)
    out = jnp.zeros((rows, cols), mats[0].dtype)
    r = c = 0
    for m in mats:
        out = out.at[r:r + m.shape[0], c:c + m.shape[1]].set(m)
        r += m.shape[0]
        c += m.shape[1]
    return out


# --------------------------------------------------------------------------
# Pallas kernel: fused (all radius groups, all neighbors) MLP + max-pool
# --------------------------------------------------------------------------
def _fused_mlp_pool_kernel(g_ref, w1_ref, w2_ref, b2_ref, o_ref):
    # g_ref : (TM*S, Kin)  rows ordered (voxel-major, neighbor-minor);
    #         channels = [g0: d_xyz|feat, g1: d_xyz|feat, ..., const 1]
    # w1_ref: (Kin, sumC1) block-diag BN-folded conv1 weights; last row = b1's
    # w2_ref: (sumC1, sumC2) block-diag BN-folded conv2 weights
    # b2_ref: (1, sumC2) f32 folded layer-2 BN bias
    # o_ref : (TM, sumC2) f32 pooled features (pcdet group-concat order)
    tm, c_out = o_ref.shape
    s = g_ref.shape[0] // tm
    # Layer 1: one wide MXU pass over all groups and all neighbors; the bias
    # rides the constant-1 channel so only ReLU is left on the VPU.
    h = jnp.dot(g_ref[...], w1_ref[...], preferred_element_type=jnp.float32)
    h = jnp.maximum(h, 0.0)
    # Layer 2 (block-diagonal across radius groups); bias/ReLU/max kept in f32
    # (v5e has no bf16 VPU).
    h = jnp.dot(h.astype(w2_ref.dtype), w2_ref[...],
                preferred_element_type=jnp.float32)
    h = jnp.maximum(h + b2_ref[...], 0.0)
    # Max-pool over the nsample axis; S % 8 == 0 makes this reshape a pure
    # shape-cast (no relayout). Output is already lane-contiguous per group.
    o_ref[...] = jnp.max(h.reshape(tm, s, c_out), axis=1)


def fused_mlp_maxpool(grouped, w1_blk, w2_blk, b2_blk, *, tile_m,
                      vmem_limit_bytes=32 * 1024 * 1024):
    """grouped: [M_pad, S, Kin] (M_pad % tile_m == 0, S % 8 == 0).

    Returns pooled features [M_pad, sumC2] float32.
    """
    m_pad, S, Kin = grouped.shape
    assert m_pad % tile_m == 0 and S % 8 == 0 and tile_m % 8 == 0
    c_mid = w1_blk.shape[1]
    c_out = w2_blk.shape[1]
    n_tiles = m_pad // tile_m
    g2d = grouped.reshape(m_pad * S, Kin)     # contiguous reshape: free in XLA

    return pl.pallas_call(
        _fused_mlp_pool_kernel,
        out_shape=jax.ShapeDtypeStruct((m_pad, c_out), jnp.float32),
        grid_spec=pltpu.PrefetchScalarGridSpec(
            num_scalar_prefetch=0,
            grid=(n_tiles,),
            in_specs=[
                pl.BlockSpec((tile_m * S, Kin), lambda i: (i, 0)),
                pl.BlockSpec((Kin, c_mid), lambda i: (0, 0)),
                pl.BlockSpec((c_mid, c_out), lambda i: (0, 0)),
                pl.BlockSpec((1, c_out), lambda i: (0, 0)),
            ],
            out_specs=pl.BlockSpec((tile_m, c_out), lambda i: (i, 0)),
        ),
        compiler_params=pltpu.CompilerParams(
            # M is embarrassingly parallel -> shards tiles across v7x's 2 TCs.
            dimension_semantics=("parallel",),
            vmem_limit_bytes=vmem_limit_bytes),
    )(g2d, w1_blk, w2_blk, b2_blk)


# --------------------------------------------------------------------------
# Plain-JAX glue reproducing get_v_coords / ball_query semantics
# --------------------------------------------------------------------------
def get_v_coords(p_range, v_size, v_indices):
    """v_indices: [M,4] (bs, z, y, x) -> v_coords [M,4] (bs, x, y, z)."""
    v_size = jnp.asarray(v_size, jnp.float32)[None, :]
    min_range = jnp.asarray(p_range[0:3], jnp.float32)[None, :]
    v_bs = v_indices[:, 0:1].astype(jnp.float32)
    v_xyz = (v_indices[:, jnp.array([3, 2, 1])].astype(jnp.float32) + 0.5) * v_size + min_range
    return jnp.concatenate([v_bs, v_xyz], axis=1)


def ball_query_idx(xyz, p_batch, new_xyz, v_batch, radius, nsample):
    """pointnet2_stack ball_query: per voxel center, first `nsample` in-ball
    points (scan order); missing slots filled with slot 0; idx=0 if empty.
    Returns (idx [M, nsample] int32, empty [M] bool).
    """
    d2 = jnp.sum((new_xyz[:, None, :] - xyz[None, :, :]) ** 2, axis=-1)      # [M, N]
    mask = (d2 < radius * radius) & (v_batch[:, None] == p_batch[None, :])
    maski = mask.astype(jnp.int32)
    rank = jnp.cumsum(maski, axis=1) - 1
    cnt = jnp.sum(maski, axis=1)
    sel = mask[:, None, :] & (rank[:, None, :] == jnp.arange(nsample)[None, :, None])
    idx = jnp.argmax(sel, axis=-1)                                           # [M, nsample]
    has = jnp.any(sel, axis=-1)
    idx = jnp.where(has, idx, idx[:, 0:1])
    empty = cnt == 0
    idx = jnp.where(empty[:, None], 0, idx)
    return idx.astype(jnp.int32), empty


# --------------------------------------------------------------------------
# P_TO_V_Module forward
# --------------------------------------------------------------------------
def p_to_v_forward(p_coords, p_features, v_indices, spatial_shape, params, cfg,
                   use_pallas=True, compute_dtype=jnp.bfloat16, tile_m=256):
    assert spatial_shape[0] == cfg["v_range"][0]
    assert spatial_shape[1] == cfg["v_range"][1]
    assert spatial_shape[2] == cfg["v_range"][2]
    v_coords = get_v_coords(cfg["point_cloud_range"], cfg["v_size"], v_indices)
    # p_batch_cnt / v_batch_cnt of the reference are handled implicitly by the
    # per-pair batch-equality mask in ball_query_idx.
    xyz = p_coords[:, 1:4]
    new_xyz = v_coords[:, 1:4]
    p_batch = p_coords[:, 0].astype(jnp.int32)
    v_batch = v_indices[:, 0].astype(jnp.int32)
    M = new_xyz.shape[0]

    # ---- grouped input, built directly in the kernel layout, pre-padded M ----
    S = _round_up(max(cfg["nsamples"]), 8)        # shared neighbor axis
    tile_m_eff, m_pad = _choose_tile_m(M, tile_m)
    pad_m = m_pad - M
    new_xyz_p = jnp.pad(new_xyz, ((0, pad_m), (0, 0))) if pad_m else new_xyz

    parts = []
    for radius, nsample in zip(cfg["radii"], cfg["nsamples"]):
        idx, empty = ball_query_idx(xyz, p_batch, new_xyz, v_batch, radius, nsample)
        if nsample < S:
            # extra slots duplicate slot 0 (exactly what pcdet pads with) ->
            # the max-pool result is unchanged.
            idx = jnp.concatenate(
                [idx, jnp.broadcast_to(idx[:, :1], (M, S - nsample))], axis=1)
        if pad_m:
            idx = jnp.pad(idx, ((0, pad_m), (0, 0)))
            empty = jnp.pad(empty, (0, pad_m), constant_values=True)
        g = jnp.concatenate([xyz[idx] - new_xyz_p[:, None, :], p_features[idx]],
                            axis=-1)                               # [m_pad, S, 3+C]
        g = jnp.where(empty[:, None, None], 0.0, g)   # zero empty balls BEFORE MLP
        parts.append(g)
    # Constant-1 channel carries the layer-1 bias through the MXU; it stays 1
    # for empty balls so they still produce ReLU(b1), matching pcdet.
    parts.append(jnp.ones((m_pad, S, 1), jnp.float32))
    grouped = jnp.concatenate(parts, axis=-1)         # [m_pad, S, G*(3+C) + 1]

    # ---- fold BN into convs; fuse radius groups block-diagonally ----
    w1s, b1s, w2s, b2s = [], [], [], []
    for (w1, s1, b1, w2, s2, b2) in params:
        w1s.append(w1 * s1); b1s.append(b1)
        w2s.append(w2 * s2); b2s.append(b2)
    w1_blk = jnp.concatenate([_block_diag(w1s), jnp.concatenate(b1s, axis=1)],
                             axis=0)                  # (Kin, sumC1), bias row last
    w2_blk = _block_diag(w2s)                         # (sumC1, sumC2)
    b2_blk = jnp.concatenate(b2s, axis=1)             # (1, sumC2)

    if use_pallas:
        out = fused_mlp_maxpool(grouped.astype(compute_dtype),
                                w1_blk.astype(compute_dtype),
                                w2_blk.astype(compute_dtype),
                                b2_blk.astype(jnp.float32),
                                tile_m=tile_m_eff)
        return out[:M]

    # Pure-JAX reference mirroring the kernel numerics at compute_dtype
    # (with compute_dtype=f32 this is mathematically the original module).
    g2 = grouped.astype(compute_dtype).reshape(m_pad * S, -1)
    h = jnp.dot(g2, w1_blk.astype(compute_dtype), preferred_element_type=jnp.float32)
    h = jnp.maximum(h, 0.0)
    h = jnp.dot(h.astype(compute_dtype), w2_blk.astype(compute_dtype),
                preferred_element_type=jnp.float32)
    h = jnp.maximum(h + b2_blk.astype(jnp.float32), 0.0)
    return jnp.max(h.reshape(m_pad, S, -1), axis=1)[:M]


def make_params(key, mlps, eps=1e-5):
    """Deterministic init: Conv2d(1x1, bias=False) kaiming-uniform-like weights,
    fresh-BatchNorm2d eval params (gamma=1, beta=0, mean=0, var=1) expressed as
    a per-channel scale/bias (folded into the weights in the forward)."""
    params = []
    for spec in mlps:
        spec = [spec[0] + 3] + list(spec[1:])   # use_xyz=True adds 3 input channels
        assert len(spec) == 3, "kernel assumes 2-layer shared MLPs (pcdet P_TO_V cfgs)"
        layer_p = []
        for i in range(len(spec) - 1):
            key, sub = jax.random.split(key)
            cin, cout = spec[i], spec[i + 1]
            bound = 1.0 / np.sqrt(cin)
            W = jax.random.uniform(sub, (cin, cout), jnp.float32, -bound, bound)
            gamma = jnp.ones((1, cout), jnp.float32)
            beta = jnp.zeros((1, cout), jnp.float32)
            mean = jnp.zeros((1, cout), jnp.float32)
            var = jnp.ones((1, cout), jnp.float32)
            scale = gamma / jnp.sqrt(var + eps)
            bias = beta - mean * scale
            layer_p += [W, scale, bias]
        params.append(tuple(layer_p))
    return params


if __name__ == "__main__":
    # ---- module config (small, consistent: range / v_size / v_range) ----
    cfg = dict(
        radii=[0.5, 1.0],
        nsamples=[16, 16],
        mlps=[[16, 16, 32], [16, 16, 32]],
        v_size=[0.2, 0.2, 0.2],                      # (vx, vy, vz)
        v_range=[4, 8, 8],                           # spatial_shape (Z, Y, X)
        point_cloud_range=[0.0, 0.0, 0.0, 1.6, 1.6, 0.8],
    )

    B = 2
    N_per, M_per, C = 128, 64, 16                    # points / voxels per batch, feat dim
    key = jax.random.PRNGKey(0)
    kxyz, kfeat, kz, ky, kx, kpar = jax.random.split(key, 6)

    # points, grouped contiguously by batch (stack-ops convention)
    xyz = jax.random.uniform(
        kxyz, (B * N_per, 3), jnp.float32,
        minval=jnp.array(cfg["point_cloud_range"][:3], jnp.float32),
        maxval=jnp.array(cfg["point_cloud_range"][3:], jnp.float32))
    p_batch = jnp.repeat(jnp.arange(B), N_per).astype(jnp.float32)
    p_coords = jnp.concatenate([p_batch[:, None], xyz], axis=1)      # [N, 4]
    p_features = jax.random.normal(kfeat, (B * N_per, C), jnp.float32)

    # sparse voxel indices [M, 4] = (bs, z, y, x), grouped by batch
    M = B * M_per
    vz = jax.random.randint(kz, (M,), 0, cfg["v_range"][0])
    vy = jax.random.randint(ky, (M,), 0, cfg["v_range"][1])
    vx = jax.random.randint(kx, (M,), 0, cfg["v_range"][2])
    vb = jnp.repeat(jnp.arange(B), M_per)
    v_indices = jnp.stack([vb, vz, vy, vx], axis=1).astype(jnp.int32)
    spatial_shape = cfg["v_range"]

    params = make_params(kpar, cfg["mlps"])

    # Pallas (block-diag group fusion, S-fused matmuls, bf16 MXU path)
    out = p_to_v_forward(p_coords, p_features, v_indices, spatial_shape,
                         params, cfg, use_pallas=True,
                         compute_dtype=jnp.bfloat16)
    out = jax.block_until_ready(out)
    assert out.shape == (M, sum(m[-1] for m in cfg["mlps"]))         # (128, 64)

    # Reference 1: plain JAX mirroring the kernel numerics (bf16 operands)
    ref_bf16 = p_to_v_forward(p_coords, p_features, v_indices, spatial_shape,
                              params, cfg, use_pallas=False,
                              compute_dtype=jnp.bfloat16)
    ref_bf16 = jax.block_until_ready(ref_bf16)
    np.testing.assert_allclose(np.asarray(out), np.asarray(ref_bf16),
                               rtol=2e-3, atol=2e-3)

    # Reference 2: full-f32 forward (checks bf16 drift stays small)
    ref_f32 = p_to_v_forward(p_coords, p_features, v_indices, spatial_shape,
                             params, cfg, use_pallas=False,
                             compute_dtype=jnp.float32)
    ref_f32 = jax.block_until_ready(ref_f32)
    np.testing.assert_allclose(np.asarray(out), np.asarray(ref_f32),
                               rtol=3e-2, atol=3e-2)

    print("KERNEL_OK")
</pallas_src>

<mosaic_0001>
module attributes {stable_mosaic.version = 11 : i64} {
  func.func @_fused_mlp_pool_kernel(%arg0: i32, %arg1: memref<1024x39xbf16, #tpu.memory_space<vmem>>, %arg2: memref<39x32xbf16, #tpu.memory_space<vmem>>, %arg3: memref<32x64xbf16, #tpu.memory_space<vmem>>, %arg4: memref<1x64xf32, #tpu.memory_space<vmem>>, %arg5: memref<64x64xf32, #tpu.memory_space<vmem>>) attributes {dimension_semantics = [#tpu.dimension_semantics<parallel>], iteration_bounds = array<i64: 2>, scalar_prefetch = 0 : i64, scratch_operands = 0 : i64, tpu.core_type = #tpu.core_type<tc>, window_params = [{transform_indices = @transform_0, window_bounds = array<i64: 1024, 39>}, {pipeline_mode = #tpu.pipeline_mode<synchronous>, transform_indices = @transform_1, window_bounds = array<i64: 39, 32>}, {pipeline_mode = #tpu.pipeline_mode<synchronous>, transform_indices = @transform_2, window_bounds = array<i64: 32, 64>}, {pipeline_mode = #tpu.pipeline_mode<synchronous>, transform_indices = @transform_3, window_bounds = array<i64: 1, 64>}, {transform_indices = @transform_4, window_bounds = array<i64: 64, 64>}]} {
    %c0 = arith.constant 0 : index
    %c0_0 = arith.constant 0 : index
    %0 = vector.load %arg1[%c0, %c0_0] : memref<1024x39xbf16, #tpu.memory_space<vmem>>, vector<1024x39xbf16>
    %c0_1 = arith.constant 0 : index
    %c0_2 = arith.constant 0 : index
    %1 = vector.load %arg2[%c0_1, %c0_2] : memref<39x32xbf16, #tpu.memory_space<vmem>>, vector<39x32xbf16>
    %cst = arith.constant dense<0.000000e+00> : vector<1024x32xf32>
    %2 = tpu.matmul %0, %1, %cst {dimension_numbers = #tpu.dot_dimension_numbers<[1], [0], [0], [1], [0, 0, 1, 1], [], []>} : vector<1024x39xbf16>, vector<39x32xbf16>, vector<1024x32xf32> -> vector<1024x32xf32>
    %cst_3 = arith.constant 0.000000e+00 : f32
    %3 = vector.broadcast %cst_3 : f32 to vector<1024x32xf32>
    %4 = arith.maximumf %2, %3 : vector<1024x32xf32>
    %5 = arith.truncf %4 : vector<1024x32xf32> to vector<1024x32xbf16>
    %c0_4 = arith.constant 0 : index
    %c0_5 = arith.constant 0 : index
    %6 = vector.load %arg3[%c0_4, %c0_5] : memref<32x64xbf16, #tpu.memory_space<vmem>>, vector<32x64xbf16>
    %cst_6 = arith.constant dense<0.000000e+00> : vector<1024x64xf32>
    %7 = tpu.matmul %5, %6, %cst_6 {dimension_numbers = #tpu.dot_dimension_numbers<[1], [0], [0], [1], [0, 0, 1, 1], [], []>} : vector<1024x32xbf16>, vector<32x64xbf16>, vector<1024x64xf32> -> vector<1024x64xf32>
    %c0_7 = arith.constant 0 : index
    %c0_8 = arith.constant 0 : index
    %8 = vector.load %arg4[%c0_7, %c0_8] : memref<1x64xf32, #tpu.memory_space<vmem>>, vector<1x64xf32>
    %9 = vector.broadcast %8 : vector<1x64xf32> to vector<1024x64xf32>
    %10 = arith.addf %7, %9 : vector<1024x64xf32>
    %cst_9 = arith.constant 0.000000e+00 : f32
    %11 = vector.broadcast %cst_9 : f32 to vector<1024x64xf32>
    %12 = arith.maximumf %10, %11 : vector<1024x64xf32>
    %13 = vector.shape_cast %12 : vector<1024x64xf32> to vector<64x16x64xf32>
    %cst_10 = arith.constant dense<0xFF800000> : vector<64x64xf32>
    %14 = vector.multi_reduction <maximumf>, %13, %cst_10 [1] : vector<64x16x64xf32> to vector<64x64xf32>
    %c0_11 = arith.constant 0 : index
    %c0_12 = arith.constant 0 : index
    %15 = vector.load %arg5[%c0_11, %c0_12] : memref<64x64xf32, #tpu.memory_space<vmem>>, vector<64x64xf32>
    tpu.vector_store %arg5[%c0_11, %c0_12], %14 {strides = array<i32>} : memref<64x64xf32, #tpu.memory_space<vmem>>, vector<64x64xf32>,
    return
  }
  func.func @transform_0(%arg0: i32) -> (i32, i32) {
    %c0_i32 = arith.constant 0 : i32
    %c0_i32_0 = arith.constant 0 : i32
    return %arg0, %c0_i32 : i32, i32
  }
  func.func @transform_1(%arg0: i32) -> (i32, i32) {
    %c0_i32 = arith.constant 0 : i32
    %c0_i32_0 = arith.constant 0 : i32
    %c0_i32_1 = arith.constant 0 : i32
    return %c0_i32, %c0_i32_0 : i32, i32
  }
  func.func @transform_2(%arg0: i32) -> (i32, i32) {
    %c0_i32 = arith.constant 0 : i32
    %c0_i32_0 = arith.constant 0 : i32
    %c0_i32_1 = arith.constant 0 : i32
    return %c0_i32, %c0_i32_0 : i32, i32
  }
  func.func @transform_3(%arg0: i32) -> (i32, i32) {
    %c0_i32 = arith.constant 0 : i32
    %c0_i32_0 = arith.constant 0 : i32
    %c0_i32_1 = arith.constant 0 : i32
    return %c0_i32, %c0_i32_0 : i32, i32
  }
  func.func @transform_4(%arg0: i32) -> (i32, i32) {
    %c0_i32 = arith.constant 0 : i32
    %c0_i32_0 = arith.constant 0 : i32
    return %arg0, %c0_i32 : i32, i32
  }
}

</mosaic_0001>

<llo_original>
// kernel: tpu_custom_call.1
$region0: #{tpu_custom_call.1}
  #allocation0 [shape = 'u32[]', space=smem, size = 0x4, offset = 0x4, fixed_abs, tag = 'smem constant byte address 0x4 - core index']
  #allocation1 [shape = 'u32[72,128]{1,0:T(1,128)}', space=vmem, size = 0x9000, scoped, tag = 'internal scratch']
  %s0 = inlined_call_operand.vmem [shape: bf16[2048,39], index: 0, kind: input, shape index: {}]
  %s1 = inlined_call_operand.vmem [shape: bf16[39,32], index: 1, kind: input, shape index: {}]
  %s2 = inlined_call_operand.vmem [shape: bf16[32,64], index: 2, kind: input, shape index: {}]
  %s3 = inlined_call_operand.vmem [shape: f32[1,64], index: 3, kind: input, shape index: {}]
  %s4 = inlined_call_operand.vmem [shape: f32[128,64], index: 4, kind: output, shape index: {}]
  %s5 = sld [smem:[#allocation0]]
  $region49: #{tpu_custom_call.1} parent=0
    _
  %s7 = ssub.s32 1, %s5
  %s8 = scalar_select 0, %s7, %s5
  loop: start=0, step=1, limit=4
  $region2: #{tpu_custom_call.1} parent=0 // loop_pre_header
    _
  $region3: #{tpu_custom_call.1} parent=0 // loop_header
    %s10 = sphi 0, %s14
    %p11 = scmp.ge.s32.totalorder %s10, 4
    %s20 = sphi 0, %s22
    %s23 = sphi 0, %s20
    %s24 = sphi 0, %s23
    %s40 = sphi 0, %s24
    %s44 = sphi 0, %s44
    %s46 = sphi 0, %s44
    %s47 = sphi 0, %s46
    %s61 = sphi 0, %s47
    %s65 = sphi 0, %s65
    %s67 = sphi 0, %s65
    %s68 = sphi 0, %s67
    %s82 = sphi 0, %s68
    %s86 = sphi 0, %s86
    %s88 = sphi 0, %s86
    %s89 = sphi 0, %s88
    %s103 = sphi 0, %s89
    %s109 = sphi 0, %s111
    %s112 = sphi 0, %s109
    %s113 = sphi 0, %s112
    %s129 = sphi 0, %s113
  $region4: #{tpu_custom_call.1} parent=0 // loop_header_branch
    %13 = sbr.rel (%p11) target = $region8
  $region5: #{tpu_custom_call.1} parent=0 // loop_body
    %s15 = ssub.s32 %s10, 1
    %s16 = ssub.s32 %s10, 2
    %s17 = sadd.s32 %s10, 1
    %s18 = ssub.s32 %s10, %s17
    %p19 = scmp.eq.s32.totalorder %s18, 0
    %s21 = sadd.s32 %s20, 1
    %s22 = scalar_select %p19, %s20, %s21
    %p25 = pneg %p19
    %p26 = scmp.eq.s32.totalorder %s10, 1
    %p27 = por %p25, %p26
    %p28 = scmp.ne.s32.totalorder %s20, %s23
    %p29 = scmp.eq.s32.totalorder %s10, 0
    %p30 = por %p28, %p29
    %p31 = scmp.ne.s32.totalorder %s20, %s23
    %p32 = scmp.eq.s32.totalorder %s15, 1
    %p33 = por %p31, %p32
    %p34 = scmp.ne.s32.totalorder %s23, %s24
    %p35 = scmp.eq.s32.totalorder %s15, 0
    %p36 = por %p34, %p35
    %p37 = scmp.ne.s32.totalorder %s23, %s24
    %p38 = scmp.eq.s32.totalorder %s16, 1
    %p39 = por %p37, %p38
    %p41 = scmp.ne.s32.totalorder %s24, %s40
    %p42 = scmp.eq.s32.totalorder %s16, 0
    %p43 = por %p41, %p42
    %s45 = sadd.s32 %s44, 1
    %p48 = scmp.eq.s32.totalorder %s10, 1
    %p49 = scmp.ne.s32.totalorder %s44, %s46
    %p50 = scmp.eq.s32.totalorder %s10, 0
    %p51 = por %p49, %p50
    %p52 = scmp.ne.s32.totalorder %s44, %s46
    %p53 = scmp.eq.s32.totalorder %s15, 1
    %p54 = por %p52, %p53
    %p55 = scmp.ne.s32.totalorder %s46, %s47
    %p56 = scmp.eq.s32.totalorder %s15, 0
    %p57 = por %p55, %p56
    %p58 = scmp.ne.s32.totalorder %s46, %s47
    %p59 = scmp.eq.s32.totalorder %s16, 1
    %p60 = por %p58, %p59
    %p62 = scmp.ne.s32.totalorder %s47, %s61
    %p63 = scmp.eq.s32.totalorder %s16, 0
    %p64 = por %p62, %p63
    %s66 = sadd.s32 %s65, 1
    %p69 = scmp.eq.s32.totalorder %s10, 1
    %p70 = scmp.ne.s32.totalorder %s65, %s67
    %p71 = scmp.eq.s32.totalorder %s10, 0
    %p72 = por %p70, %p71
    %p73 = scmp.ne.s32.totalorder %s65, %s67
    %p74 = scmp.eq.s32.totalorder %s15, 1
    %p75 = por %p73, %p74
    %p76 = scmp.ne.s32.totalorder %s67, %s68
    %p77 = scmp.eq.s32.totalorder %s15, 0
    %p78 = por %p76, %p77
    %p79 = scmp.ne.s32.totalorder %s67, %s68
    %p80 = scmp.eq.s32.totalorder %s16, 1
    %p81 = por %p79, %p80
    %p83 = scmp.ne.s32.totalorder %s68, %s82
    %p84 = scmp.eq.s32.totalorder %s16, 0
    %p85 = por %p83, %p84
    %s87 = sadd.s32 %s86, 1
    %p90 = scmp.eq.s32.totalorder %s10, 1
    %p91 = scmp.ne.s32.totalorder %s86, %s88
    %p92 = scmp.eq.s32.totalorder %s10, 0
    %p93 = por %p91, %p92
    %p94 = scmp.ne.s32.totalorder %s86, %s88
    %p95 = scmp.eq.s32.totalorder %s15, 1
    %p96 = por %p94, %p95
    %p97 = scmp.ne.s32.totalorder %s88, %s89
    %p98 = scmp.eq.s32.totalorder %s15, 0
    %p99 = por %p97, %p98
    %p100 = scmp.ne.s32.totalorder %s88, %s89
    %p101 = scmp.eq.s32.totalorder %s16, 1
    %p102 = por %p100, %p101
    %p104 = scmp.ne.s32.totalorder %s89, %s103
    %p105 = scmp.eq.s32.totalorder %s16, 0
    %p106 = por %p104, %p105
    %s107 = ssub.s32 %s10, %s17
    %p108 = scmp.eq.s32.totalorder %s107, 0
    %s110 = sadd.s32 %s109, 1
    %s111 = scalar_select %p108, %s109, %s110
    %p114 = pneg %p108
    %p115 = scmp.eq.s32.totalorder %s10, 1
    %p116 = por %p114, %p115
    %p117 = scmp.ne.s32.totalorder %s109, %s112
    %p118 = scmp.eq.s32.totalorder %s10, 0
    %p119 = por %p117, %p118
    %p120 = scmp.ne.s32.totalorder %s109, %s112
    %p121 = scmp.eq.s32.totalorder %s15, 1
    %p122 = por %p120, %p121
    %p123 = scmp.ne.s32.totalorder %s112, %s113
    %p124 = scmp.eq.s32.totalorder %s15, 0
    %p125 = por %p123, %p124
    %p126 = scmp.ne.s32.totalorder %s112, %s113
    %p127 = scmp.eq.s32.totalorder %s16, 1
    %p128 = por %p126, %p127
    %p130 = scmp.ne.s32.totalorder %s113, %s129
    %p131 = scmp.eq.s32.totalorder %s16, 0
    %p132 = por %p130, %p131
    %p133 = scmp.le.s32.totalorder 1, %s10
    %p134 = scmp.lt.s32.totalorder %s10, 3
    %p135 = pnand %p133, %p134
    %p136 = pneg %p135
    // Predicated region
    $region9: #{tpu_custom_call.1} parent=5 // pred_check
      _
    $region10: #{tpu_custom_call.1} parent=5 // pred_check_branch
      %138 = sbr.rel (%p135) target = $region12
    $region11: #{tpu_custom_call.1} parent=5 // pred_region
      %s139 = ssub.s32 %s10, 1
      // Predicated region
      $region13: #{tpu_custom_call.1} parent=11 // pred_check
        %p140 = pneg %p57
      $region14: #{tpu_custom_call.1} parent=11 // pred_check_branch
        %142 = sbr.rel (%p140) target = $region16
      $region15: #{tpu_custom_call.1} parent=11 // pred_region
        _
      $region16: #{tpu_custom_call.1} parent=11 // pred_fallthru
        _
      // Predicated region
      $region17: #{tpu_custom_call.1} parent=11 // pred_check
        %p143 = pneg %p78
      $region18: #{tpu_custom_call.1} parent=11 // pred_check_branch
        %145 = sbr.rel (%p143) target = $region20
      $region19: #{tpu_custom_call.1} parent=11 // pred_region
        _
      $region20: #{tpu_custom_call.1} parent=11 // pred_fallthru
        _
      // Predicated region
      $region21: #{tpu_custom_call.1} parent=11 // pred_check
        %p146 = pneg %p99
      $region22: #{tpu_custom_call.1} parent=11 // pred_check_branch
        %148 = sbr.rel (%p146) target = $region24
      $region23: #{tpu_custom_call.1} parent=11 // pred_region
        _
      $region24: #{tpu_custom_call.1} parent=11 // pred_fallthru
        _
    $region12: #{tpu_custom_call.1} parent=5 // pred_fallthru
      _
    %p149 = scmp.lt.s32.totalorder %s10, 2
    // Predicated region
    $region25: #{tpu_custom_call.1} parent=5 // pred_check
      %p150 = pneg %p149
    $region26: #{tpu_custom_call.1} parent=5 // pred_check_branch
      %152 = sbr.rel (%p150) target = $region28
    $region27: #{tpu_custom_call.1} parent=5 // pred_region
      // Predicated region
      $region29: #{tpu_custom_call.1} parent=27 // pred_check
        %p153 = pneg %p30
      $region30: #{tpu_custom_call.1} parent=27 // pred_check_branch
        %155 = sbr.rel (%p153) target = $region32
      $region31: #{tpu_custom_call.1} parent=27 // pred_region
        %s156 = smul.u32 128, %s10
        %p157 = scmp.lt.s32.totalorder %s156, 255
        %s158 = scalar_select %p157, %s156, 255
        %s159 = smul.addr %s158, 4
        %s160 = scalar_lea.vmem %s0, %s159
        %s161 = smul.u32 128, %s10
      $region32: #{tpu_custom_call.1} parent=27 // pred_fallthru
        _
    $region28: #{tpu_custom_call.1} parent=5 // pred_fallthru
      _
    %p162 = scmp.le.s32.totalorder 1, %s10
    %p163 = scmp.lt.s32.totalorder %s10, 3
    %p164 = pnand %p162, %p163
    %p165 = pneg %p164
    // Predicated region
    $region33: #{tpu_custom_call.1} parent=5 // pred_check
      _
    $region34: #{tpu_custom_call.1} parent=5 // pred_check_branch
      %167 = sbr.rel (%p164) target = $region36
    $region35: #{tpu_custom_call.1} parent=5 // pred_region
      %s168 = ssub.s32 %s10, 1
      %s169 = smul.u32 128, %s15
      %p170 = scmp.lt.s32.totalorder %s169, 255
      %s171 = scalar_select %p170, %s169, 255
      %s172 = smul.addr %s171, 4
      %s173 = scalar_lea.vmem %s0, %s172
      %p174 = pneg %p36
      %p175 = pneg %p33
      %p176 = pneg %p57
      %p177 = pneg %p54
      %p178 = pneg %p78
      %p179 = pneg %p75
      %p180 = pneg %p99
      %p181 = pneg %p96
      %p182 = pneg %p125
      %p183 = pneg %p122
      %s184 = smul.u32 8, %s15
      %p185 = scmp.lt.s32.totalorder %s184, 15
      %s186 = scalar_select %p185, %s184, 15
      %s187 = smul.addr %s186, 8
      %s188 = scalar_lea.vmem %s4, %s187
      %s189 = smul.u32 128, %s15
      %p190 = scmp.lt.s32.totalorder %s189, 255
      %s191 = scalar_select %p190, %s189, 255
      %s192 = smul.addr %s191, 4
      %s193 = scalar_lea.vmem %s0, %s192
      %s194 = smul.u32 128, %s15
      %s195 = smul.u32 8, %s15
      %p196 = scmp.lt.s32.totalorder %s195, 15
      %s197 = scalar_select %p196, %s195, 15
      %s198 = smul.addr %s197, 8
      %s199 = scalar_lea.vmem %s4, %s198
      %s200 = smul.u32 8, %s15
      %v202 = vld [vmem:[%s193] sm:$0xf]
      %v203 = vld [vmem:[%s193 + $0x4] sm:$0xf]
      %v204 = vld [vmem:[%s193 + $0x8] sm:$0xf]
      %v205 = vld [vmem:[%s193 + $0xc] sm:$0xf]
      %v206 = vld [vmem:[%s193 + $0x10] sm:$0xf]
      %v207 = vld [vmem:[%s193 + $0x14] sm:$0xf]
      %v208 = vld [vmem:[%s193 + $0x18] sm:$0xf]
      %v209 = vld [vmem:[%s193 + $0x1c] sm:$0xf]
      %v210 = vld [vmem:[%s193 + $0x20] sm:$0xf]
      %v211 = vld [vmem:[%s193 + $0x24] sm:$0xf]
      %v212 = vld [vmem:[%s193 + $0x28] sm:$0xf]
      %v213 = vld [vmem:[%s193 + $0x2c] sm:$0xf]
      %v214 = vld [vmem:[%s193 + $0x30] sm:$0xf]
      %v215 = vld [vmem:[%s193 + $0x34] sm:$0xf]
      %v216 = vld [vmem:[%s193 + $0x38] sm:$0xf]
      %v217 = vld [vmem:[%s193 + $0x3c] sm:$0xf]
      %v218 = vld [vmem:[%s193 + $0x40] sm:$0xf]
      %v219 = vld [vmem:[%s193 + $0x44] sm:$0xf]
      %v220 = vld [vmem:[%s193 + $0x48] sm:$0xf]
      %v221 = vld [vmem:[%s193 + $0x4c] sm:$0xf]
      %v222 = vld [vmem:[%s193 + $0x50] sm:$0xf]
      %v223 = vld [vmem:[%s193 + $0x54] sm:$0xf]
      %v224 = vld [vmem:[%s193 + $0x58] sm:$0xf]
      %v225 = vld [vmem:[%s193 + $0x5c] sm:$0xf]
      %v226 = vld [vmem:[%s193 + $0x60] sm:$0xf]
      %v227 = vld [vmem:[%s193 + $0x64] sm:$0xf]
      %v228 = vld [vmem:[%s193 + $0x68] sm:$0xf]
      %v229 = vld [vmem:[%s193 + $0x6c] sm:$0xf]
      %v230 = vld [vmem:[%s193 + $0x70] sm:$0xf]
      %v231 = vld [vmem:[%s193 + $0x74] sm:$0xf]
      %v232 = vld [vmem:[%s193 + $0x78] sm:$0xf]
      %v233 = vld [vmem:[%s193 + $0x7c] sm:$0xf]
      %v234 = vld [vmem:[%s193 + $0x80] sm:$0xf]
      %v235 = vld [vmem:[%s193 + $0x84] sm:$0xf]
      %v236 = vld [vmem:[%s193 + $0x88] sm:$0xf]
      %v237 = vld [vmem:[%s193 + $0x8c] sm:$0xf]
      %v238 = vld [vmem:[%s193 + $0x90] sm:$0xf]
      %v239 = vld [vmem:[%s193 + $0x94] sm:$0xf]
      %v240 = vld [vmem:[%s193 + $0x98] sm:$0xf]
      %v241 = vld [vmem:[%s193 + $0x9c] sm:$0xf]
      %v242 = vld [vmem:[%s193 + $0xa0] sm:$0xf]
      %v243 = vld [vmem:[%s193 + $0xa4] sm:$0xf]
      %v244 = vld [vmem:[%s193 + $0xa8] sm:$0xf]
      %v245 = vld [vmem:[%s193 + $0xac] sm:$0xf]
      %v246 = vld [vmem:[%s193 + $0xb0] sm:$0xf]
      %v247 = vld [vmem:[%s193 + $0xb4] sm:$0xf]
      %v248 = vld [vmem:[%s193 + $0xb8] sm:$0xf]
      %v249 = vld [vmem:[%s193 + $0xbc] sm:$0xf]
      %v250 = vld [vmem:[%s193 + $0xc0] sm:$0xf]
      %v251 = vld [vmem:[%s193 + $0xc4] sm:$0xf]
      %v252 = vld [vmem:[%s193 + $0xc8] sm:$0xf]
      %v253 = vld [vmem:[%s193 + $0xcc] sm:$0xf]
      %v254 = vld [vmem:[%s193 + $0xd0] sm:$0xf]
      %v255 = vld [vmem:[%s193 + $0xd4] sm:$0xf]
      %v256 = vld [vmem:[%s193 + $0xd8] sm:$0xf]
      %v257 = vld [vmem:[%s193 + $0xdc] sm:$0xf]
      %v258 = vld [vmem:[%s193 + $0xe0] sm:$0xf]
      %v259 = vld [vmem:[%s193 + $0xe4] sm:$0xf]
      %v260 = vld [vmem:[%s193 + $0xe8] sm:$0xf]
      %v261 = vld [vmem:[%s193 + $0xec] sm:$0xf]
      %v262 = vld [vmem:[%s193 + $0xf0] sm:$0xf]
      %v263 = vld [vmem:[%s193 + $0xf4] sm:$0xf]
      %v264 = vld [vmem:[%s193 + $0xf8] sm:$0xf]
      %v265 = vld [vmem:[%s193 + $0xfc] sm:$0xf]
      %v266 = vld [vmem:[%s193 + $0x100] sm:$0xf]
      %v267 = vld [vmem:[%s193 + $0x104] sm:$0xf]
      %v268 = vld [vmem:[%s193 + $0x108] sm:$0xf]
      %v269 = vld [vmem:[%s193 + $0x10c] sm:$0xf]
      %v270 = vld [vmem:[%s193 + $0x110] sm:$0xf]
      %v271 = vld [vmem:[%s193 + $0x114] sm:$0xf]
      %v272 = vld [vmem:[%s193 + $0x118] sm:$0xf]
      %v273 = vld [vmem:[%s193 + $0x11c] sm:$0xf]
      %v274 = vld [vmem:[%s193 + $0x120] sm:$0xf]
      %v275 = vld [vmem:[%s193 + $0x124] sm:$0xf]
      %v276 = vld [vmem:[%s193 + $0x128] sm:$0xf]
      %v277 = vld [vmem:[%s193 + $0x12c] sm:$0xf]
      %v278 = vld [vmem:[%s193 + $0x130] sm:$0xf]
      %v279 = vld [vmem:[%s193 + $0x134] sm:$0xf]
      %v280 = vld [vmem:[%s193 + $0x138] sm:$0xf]
      %v281 = vld [vmem:[%s193 + $0x13c] sm:$0xf]
      %v282 = vld [vmem:[%s193 + $0x140] sm:$0xf]
      %v283 = vld [vmem:[%s193 + $0x144] sm:$0xf]
      %v284 = vld [vmem:[%s193 + $0x148] sm:$0xf]
      %v285 = vld [vmem:[%s193 + $0x14c] sm:$0xf]
      %v286 = vld [vmem:[%s193 + $0x150] sm:$0xf]
      %v287 = vld [vmem:[%s193 + $0x154] sm:$0xf]
      %v288 = vld [vmem:[%s193 + $0x158] sm:$0xf]
      %v289 = vld [vmem:[%s193 + $0x15c] sm:$0xf]
      %v290 = vld [vmem:[%s193 + $0x160] sm:$0xf]
      %v291 = vld [vmem:[%s193 + $0x164] sm:$0xf]
      %v292 = vld [vmem:[%s193 + $0x168] sm:$0xf]
      %v293 = vld [vmem:[%s193 + $0x16c] sm:$0xf]
      %v294 = vld [vmem:[%s193 + $0x170] sm:$0xf]
      %v295 = vld [vmem:[%s193 + $0x174] sm:$0xf]
      %v296 = vld [vmem:[%s193 + $0x178] sm:$0xf]
      %v297 = vld [vmem:[%s193 + $0x17c] sm:$0xf]
      %v298 = vld [vmem:[%s193 + $0x180] sm:$0xf]
      %v299 = vld [vmem:[%s193 + $0x184] sm:$0xf]
      %v300 = vld [vmem:[%s193 + $0x188] sm:$0xf]
      %v301 = vld [vmem:[%s193 + $0x18c] sm:$0xf]
      %v302 = vld [vmem:[%s193 + $0x190] sm:$0xf]
      %v303 = vld [vmem:[%s193 + $0x194] sm:$0xf]
      %v304 = vld [vmem:[%s193 + $0x198] sm:$0xf]
      %v305 = vld [vmem:[%s193 + $0x19c] sm:$0xf]
      %v306 = vld [vmem:[%s193 + $0x1a0] sm:$0xf]
      %v307 = vld [vmem:[%s193 + $0x1a4] sm:$0xf]
      %v308 = vld [vmem:[%s193 + $0x1a8] sm:$0xf]
      %v309 = vld [vmem:[%s193 + $0x1ac] sm:$0xf]
      %v310 = vld [vmem:[%s193 + $0x1b0] sm:$0xf]
      %v311 = vld [vmem:[%s193 + $0x1b4] sm:$0xf]
      %v312 = vld [vmem:[%s193 + $0x1b8] sm:$0xf]
      %v313 = vld [vmem:[%s193 + $0x1bc] sm:$0xf]
      %v314 = vld [vmem:[%s193 + $0x1c0] sm:$0xf]
      %v315 = vld [vmem:[%s193 + $0x1c4] sm:$0xf]
      %v316 = vld [vmem:[%s193 + $0x1c8] sm:$0xf]
      %v317 = vld [vmem:[%s193 + $0x1cc] sm:$0xf]
      %v318 = vld [vmem:[%s193 + $0x1d0] sm:$0xf]
      %v319 = vld [vmem:[%s193 + $0x1d4] sm:$0xf]
      %v320 = vld [vmem:[%s193 + $0x1d8] sm:$0xf]
      %v321 = vld [vmem:[%s193 + $0x1dc] sm:$0xf]
      %v322 = vld [vmem:[%s193 + $0x1e0] sm:$0xf]
      %v323 = vld [vmem:[%s193 + $0x1e4] sm:$0xf]
      %v324 = vld [vmem:[%s193 + $0x1e8] sm:$0xf]
      %v325 = vld [vmem:[%s193 + $0x1ec] sm:$0xf]
      %v326 = vld [vmem:[%s193 + $0x1f0] sm:$0xf]
      %v327 = vld [vmem:[%s193 + $0x1f4] sm:$0xf]
      %v328 = vld [vmem:[%s193 + $0x1f8] sm:$0xf]
      %v329 = vld [vmem:[%s193 + $0x1fc] sm:$0xf]
      %v330 = vld [vmem:[%s1] sm:$0xf]
      %v331 = vld [vmem:[%s1 + $0x4] sm:$0xf]
      %v332 = vld [vmem:[%s1 + $0x8] sm:$0xf]
      %v333 = vld [vmem:[%s1 + $0xc] sm:$0xf]
      %v334 = vld [vmem:[%s1 + $0x10] sm:$0xf]
      %v463 = vunpack.c.l.b16 %v202
      %v464 = vunpack.c.l.b16 %v203
      %v465 = vunpack.c.l.b16 %v204
      %v466 = vunpack.c.l.b16 %v205
      %v467 = vunpack.c.l.b16 %v206
      %v468 = vunpack.c.l.b16 %v207
      %v469 = vunpack.c.l.b16 %v208
      %v470 = vunpack.c.l.b16 %v209
      %v471 = vunpack.c.l.b16 %v210
      %v472 = vunpack.c.l.b16 %v211
      %v473 = vunpack.c.l.b16 %v212
      %v474 = vunpack.c.l.b16 %v213
      %v475 = vunpack.c.l.b16 %v214
      %v476 = vunpack.c.l.b16 %v215
      %v477 = vunpack.c.l.b16 %v216
      %v478 = vunpack.c.l.b16 %v217
      %v479 = vunpack.c.l.b16 %v218
      %v480 = vunpack.c.l.b16 %v219
      %v481 = vunpack.c.l.b16 %v220
      %v482 = vunpack.c.l.b16 %v221
      %v483 = vunpack.c.l.b16 %v222
      %v484 = vunpack.c.l.b16 %v223
      %v485 = vunpack.c.l.b16 %v224
      %v486 = vunpack.c.l.b16 %v225
      %v487 = vunpack.c.l.b16 %v226
      %v488 = vunpack.c.l.b16 %v227
      %v489 = vunpack.c.l.b16 %v228
      %v490 = vunpack.c.l.b16 %v229
      %v491 = vunpack.c.l.b16 %v230
      %v492 = vunpack.c.l.b16 %v231
      %v493 = vunpack.c.l.b16 %v232
      %v494 = vunpack.c.l.b16 %v233
      %v495 = vunpack.c.l.b16 %v234
      %v496 = vunpack.c.l.b16 %v235
      %v497 = vunpack.c.l.b16 %v236
      %v498 = vunpack.c.l.b16 %v237
      %v499 = vunpack.c.l.b16 %v238
      %v500 = vunpack.c.l.b16 %v239
      %v501 = vunpack.c.l.b16 %v240
      %v502 = vunpack.c.l.b16 %v241
      %v503 = vunpack.c.l.b16 %v242
      %v504 = vunpack.c.l.b16 %v243
      %v505 = vunpack.c.l.b16 %v244
      %v506 = vunpack.c.l.b16 %v245
      %v507 = vunpack.c.l.b16 %v246
      %v508 = vunpack.c.l.b16 %v247
      %v509 = vunpack.c.l.b16 %v248
      %v510 = vunpack.c.l.b16 %v249
      %v511 = vunpack.c.l.b16 %v250
      %v512 = vunpack.c.l.b16 %v251
      %v513 = vunpack.c.l.b16 %v252
      %v514 = vunpack.c.l.b16 %v253
      %v515 = vunpack.c.l.b16 %v254
      %v516 = vunpack.c.l.b16 %v255
      %v517 = vunpack.c.l.b16 %v256
      %v518 = vunpack.c.l.b16 %v257
      %v519 = vunpack.c.l.b16 %v258
      %v520 = vunpack.c.l.b16 %v259
      %v521 = vunpack.c.l.b16 %v260
      %v522 = vunpack.c.l.b16 %v261
      %v523 = vunpack.c.l.b16 %v262
      %v524 = vunpack.c.l.b16 %v263
      %v525 = vunpack.c.l.b16 %v264
      %v526 = vunpack.c.l.b16 %v265
      %v527 = vunpack.c.l.b16 %v266
      %v528 = vunpack.c.l.b16 %v267
      %v529 = vunpack.c.l.b16 %v268
      %v530 = vunpack.c.l.b16 %v269
      %v531 = vunpack.c.l.b16 %v270
      %v532 = vunpack.c.l.b16 %v271
      %v533 = vunpack.c.l.b16 %v272
      %v534 = vunpack.c.l.b16 %v273
      %v535 = vunpack.c.l.b16 %v274
      %v536 = vunpack.c.l.b16 %v275
      %v537 = vunpack.c.l.b16 %v276
      %v538 = vunpack.c.l.b16 %v277
      %v539 = vunpack.c.l.b16 %v278
      %v540 = vunpack.c.l.b16 %v279
      %v541 = vunpack.c.l.b16 %v280
      %v542 = vunpack.c.l.b16 %v281
      %v543 = vunpack.c.l.b16 %v282
      %v544 = vunpack.c.l.b16 %v283
      %v545 = vunpack.c.l.b16 %v284
      %v546 = vunpack.c.l.b16 %v285
      %v547 = vunpack.c.l.b16 %v286
      %v548 = vunpack.c.l.b16 %v287
      %v549 = vunpack.c.l.b16 %v288
      %v550 = vunpack.c.l.b16 %v289
      %v551 = vunpack.c.l.b16 %v290
      %v552 = vunpack.c.l.b16 %v291
      %v553 = vunpack.c.l.b16 %v292
      %v554 = vunpack.c.l.b16 %v293
      %v555 = vunpack.c.l.b16 %v294
      %v556 = vunpack.c.l.b16 %v295
      %v557 = vunpack.c.l.b16 %v296
      %v558 = vunpack.c.l.b16 %v297
      %v559 = vunpack.c.l.b16 %v298
      %v560 = vunpack.c.l.b16 %v299
      %v561 = vunpack.c.l.b16 %v300
      %v562 = vunpack.c.l.b16 %v301
      %v563 = vunpack.c.l.b16 %v302
      %v564 = vunpack.c.l.b16 %v303
      %v565 = vunpack.c.l.b16 %v304
      %v566 = vunpack.c.l.b16 %v305
      %v567 = vunpack.c.l.b16 %v306
      %v568 = vunpack.c.l.b16 %v307
      %v569 = vunpack.c.l.b16 %v308
      %v570 = vunpack.c.l.b16 %v309
      %v571 = vunpack.c.l.b16 %v310
      %v572 = vunpack.c.l.b16 %v311
      %v573 = vunpack.c.l.b16 %v312
      %v574 = vunpack.c.l.b16 %v313
      %v575 = vunpack.c.l.b16 %v314
      %v576 = vunpack.c.l.b16 %v315
      %v577 = vunpack.c.l.b16 %v316
      %v578 = vunpack.c.l.b16 %v317
      %v579 = vunpack.c.l.b16 %v318
      %v580 = vunpack.c.l.b16 %v319
      %v581 = vunpack.c.l.b16 %v320
      %v582 = vunpack.c.l.b16 %v321
      %v583 = vunpack.c.l.b16 %v322
      %v584 = vunpack.c.l.b16 %v323
      %v585 = vunpack.c.l.b16 %v324
      %v586 = vunpack.c.l.b16 %v325
      %v587 = vunpack.c.l.b16 %v326
      %v588 = vunpack.c.l.b16 %v327
      %v589 = vunpack.c.l.b16 %v328
      %v590 = vunpack.c.l.b16 %v329
      %v591 = vpack.c.b16 %v464, %v463
      %v592 = vpack.c.b16 %v466, %v465
      %v593 = vpack.c.b16 %v468, %v467
      %v594 = vpack.c.b16 %v470, %v469
      %v595 = vpack.c.b16 %v472, %v471
      %v596 = vpack.c.b16 %v474, %v473
      %v597 = vpack.c.b16 %v476, %v475
      %v598 = vpack.c.b16 %v478, %v477
      %v599 = vpack.c.b16 %v480, %v479
      %v600 = vpack.c.b16 %v482, %v481
      %v601 = vpack.c.b16 %v484, %v483
      %v602 = vpack.c.b16 %v486, %v485
      %v603 = vpack.c.b16 %v488, %v487
      %v604 = vpack.c.b16 %v490, %v489
      %v605 = vpack.c.b16 %v492, %v491
      %v606 = vpack.c.b16 %v494, %v493
      %v607 = vpack.c.b16 %v496, %v495
      %v608 = vpack.c.b16 %v498, %v497
      %v609 = vpack.c.b16 %v500, %v499
      %v610 = vpack.c.b16 %v502, %v501
      %v611 = vpack.c.b16 %v504, %v503
      %v612 = vpack.c.b16 %v506, %v505
      %v613 = vpack.c.b16 %v508, %v507
      %v614 = vpack.c.b16 %v510, %v509
      %v615 = vpack.c.b16 %v512, %v511
      %v616 = vpack.c.b16 %v514, %v513
      %v617 = vpack.c.b16 %v516, %v515
      %v618 = vpack.c.b16 %v518, %v517
      %v619 = vpack.c.b16 %v520, %v519
      %v620 = vpack.c.b16 %v522, %v521
      %v621 = vpack.c.b16 %v524, %v523
      %v622 = vpack.c.b16 %v526, %v525
      %v623 = vpack.c.b16 %v528, %v527
      %v624 = vpack.c.b16 %v530, %v529
      %v625 = vpack.c.b16 %v532, %v531
      %v626 = vpack.c.b16 %v534, %v533
      %v627 = vpack.c.b16 %v536, %v535
      %v628 = vpack.c.b16 %v538, %v537
      %v629 = vpack.c.b16 %v540, %v539
      %v630 = vpack.c.b16 %v542, %v541
      %v631 = vpack.c.b16 %v544, %v543
      %v632 = vpack.c.b16 %v546, %v545
      %v633 = vpack.c.b16 %v548, %v547
      %v634 = vpack.c.b16 %v550, %v549
      %v635 = vpack.c.b16 %v552, %v551
      %v636 = vpack.c.b16 %v554, %v553
      %v637 = vpack.c.b16 %v556, %v555
      %v638 = vpack.c.b16 %v558, %v557
      %v639 = vpack.c.b16 %v560, %v559
      %v640 = vpack.c.b16 %v562, %v561
      %v641 = vpack.c.b16 %v564, %v563
      %v642 = vpack.c.b16 %v566, %v565
      %v643 = vpack.c.b16 %v568, %v567
      %v644 = vpack.c.b16 %v570, %v569
      %v645 = vpack.c.b16 %v572, %v571
      %v646 = vpack.c.b16 %v574, %v573
      %v647 = vpack.c.b16 %v576, %v575
      %v648 = vpack.c.b16 %v578, %v577
      %v649 = vpack.c.b16 %v580, %v579
      %v650 = vpack.c.b16 %v582, %v581
      %v651 = vpack.c.b16 %v584, %v583
      %v652 = vpack.c.b16 %v586, %v585
      %v653 = vpack.c.b16 %v588, %v587
      %v654 = vpack.c.b16 %v590, %v589
      %v660 = vunpack.c.l.b16 %v330
      %v661 = vunpack.c.l.b16 %v331
      %v662 = vunpack.c.l.b16 %v332
      %v663 = vunpack.c.l.b16 %v333
      %v664 = vunpack.c.l.b16 %v334
      %v665 = vpack.c.b16 %v661, %v660
      %v666 = vpack.c.b16 %v663, %v662
      %v667 = vpack.c.b16 %v664, %v664
      %vm670 = vcmask 318464
      %v672 = vsel %vm670, %v591, 0
      %v675 = vsel %vm670, %v592, 0
      %v678 = vsel %vm670, %v593, 0
      %v681 = vsel %vm670, %v594, 0
      %v684 = vsel %vm670, %v595, 0
      %v687 = vsel %vm670, %v596, 0
      %v690 = vsel %vm670, %v597, 0
      %v693 = vsel %vm670, %v598, 0
      %v696 = vsel %vm670, %v599, 0
      %v699 = vsel %vm670, %v600, 0
      %v702 = vsel %vm670, %v601, 0
      %v705 = vsel %vm670, %v602, 0
      %v708 = vsel %vm670, %v603, 0
      %v711 = vsel %vm670, %v604, 0
      %v714 = vsel %vm670, %v605, 0
      %v717 = vsel %vm670, %v606, 0
      %v720 = vsel %vm670, %v607, 0
      %v723 = vsel %vm670, %v608, 0
      %v726 = vsel %vm670, %v609, 0
      %v729 = vsel %vm670, %v610, 0
      %v732 = vsel %vm670, %v611, 0
      %v735 = vsel %vm670, %v612, 0
      %v738 = vsel %vm670, %v613, 0
      %v741 = vsel %vm670, %v614, 0
      %v744 = vsel %vm670, %v615, 0
      %v747 = vsel %vm670, %v616, 0
      %v750 = vsel %vm670, %v617, 0
      %v753 = vsel %vm670, %v618, 0
      %v756 = vsel %vm670, %v619, 0
      %v759 = vsel %vm670, %v620, 0
      %v762 = vsel %vm670, %v621, 0
      %v765 = vsel %vm670, %v622, 0
      %v768 = vsel %vm670, %v623, 0
      %v771 = vsel %vm670, %v624, 0
      %v774 = vsel %vm670, %v625, 0
      %v777 = vsel %vm670, %v626, 0
      %v780 = vsel %vm670, %v627, 0
      %v783 = vsel %vm670, %v628, 0
      %v786 = vsel %vm670, %v629, 0
      %v789 = vsel %vm670, %v630, 0
      %v792 = vsel %vm670, %v631, 0
      %v795 = vsel %vm670, %v632, 0
      %v798 = vsel %vm670, %v633, 0
      %v801 = vsel %vm670, %v634, 0
      %v804 = vsel %vm670, %v635, 0
      %v807 = vsel %vm670, %v636, 0
      %v810 = vsel %vm670, %v637, 0
      %v813 = vsel %vm670, %v638, 0
      %v816 = vsel %vm670, %v639, 0
      %v819 = vsel %vm670, %v640, 0
      %v822 = vsel %vm670, %v641, 0
      %v825 = vsel %vm670, %v642, 0
      %v828 = vsel %vm670, %v643, 0
      %v831 = vsel %vm670, %v644, 0
      %v834 = vsel %vm670, %v645, 0
      %v837 = vsel %vm670, %v646, 0
      %v840 = vsel %vm670, %v647, 0
      %v843 = vsel %vm670, %v648, 0
      %v846 = vsel %vm670, %v649, 0
      %v849 = vsel %vm670, %v650, 0
      %v852 = vsel %vm670, %v651, 0
      %v855 = vsel %vm670, %v652, 0
      %v858 = vsel %vm670, %v653, 0
      %v861 = vsel %vm670, %v654, 0
      %vm863 = vcmask 1042432
      %vm864 = vcmask 1043456
      %v865 = vsel %vm863, 4294967295, 65535
      %v866 = vsel %vm864, %v865, 0
      %v868 = vand.u32 %v667, %v866
      %870 = vmatpush.bf16.msra.mxu0 0
      %871 = vmatpush.bf16.msra.mxu0 0
      %872 = vmatpush.bf16.msra.mxu0 0
      %873 = vmatpush.bf16.msra.mxu0 0
      %874 = vmatpush.bf16.msra.mxu0 0
      %875 = vmatpush.bf16.msra.mxu0 %v868
      %876 = vmatpush.bf16.msra.mxu0 %v666
      %877 = vmatpush.bf16.msra.mxu0 %v665
      %878 = vmatmul.bf16.gmra.mxu0 %v672
      %v879 = vpop.f32.mrf.mxu0
      %v880 = vadd.f32 0.0, %v879
      %v881 = vpop.f32.mrf.mxu0
      %v882 = vadd.f32 0.0, %v881
      %883 = vmatmul.bf16.gmra.mxu0 %v675
      %v884 = vpop.f32.mrf.mxu0
      %v885 = vadd.f32 0.0, %v884
      %v886 = vpop.f32.mrf.mxu0
      %v887 = vadd.f32 0.0, %v886
      %888 = vmatmul.bf16.gmra.mxu0 %v678
      %v889 = vpop.f32.mrf.mxu0
      %v890 = vadd.f32 0.0, %v889
      %v891 = vpop.f32.mrf.mxu0
      %v892 = vadd.f32 0.0, %v891
      %893 = vmatmul.bf16.gmra.mxu0 %v681
      %v894 = vpop.f32.mrf.mxu0
      %v895 = vadd.f32 0.0, %v894
      %v896 = vpop.f32.mrf.mxu0
      %v897 = vadd.f32 0.0, %v896
      %898 = vmatmul.bf16.gmra.mxu0 %v684
      %v899 = vpop.f32.mrf.mxu0
      %v900 = vadd.f32 0.0, %v899
      %v901 = vpop.f32.mrf.mxu0
      %v902 = vadd.f32 0.0, %v901
      %903 = vmatmul.bf16.gmra.mxu0 %v687
      %v904 = vpop.f32.mrf.mxu0
      %v905 = vadd.f32 0.0, %v904
      %v906 = vpop.f32.mrf.mxu0
      %v907 = vadd.f32 0.0, %v906
      %908 = vmatmul.bf16.gmra.mxu0 %v690
      %v909 = vpop.f32.mrf.mxu0
      %v910 = vadd.f32 0.0, %v909
      %v911 = vpop.f32.mrf.mxu0
      %v912 = vadd.f32 0.0, %v911
      %913 = vmatmul.bf16.gmra.mxu0 %v693
      %v914 = vpop.f32.mrf.mxu0
      %v915 = vadd.f32 0.0, %v914
      %v916 = vpop.f32.mrf.mxu0
      %v917 = vadd.f32 0.0, %v916
      %918 = vmatmul.bf16.gmra.mxu0 %v696
      %v919 = vpop.f32.mrf.mxu0
      %v920 = vadd.f32 0.0, %v919
      %v921 = vpop.f32.mrf.mxu0
      %v922 = vadd.f32 0.0, %v921
      %923 = vmatmul.bf16.gmra.mxu0 %v699
      %v924 = vpop.f32.mrf.mxu0
      %v925 = vadd.f32 0.0, %v924
      %v926 = vpop.f32.mrf.mxu0
      %v927 = vadd.f32 0.0, %v926
      %928 = vmatmul.bf16.gmra.mxu0 %v702
      %v929 = vpop.f32.mrf.mxu0
      %v930 = vadd.f32 0.0, %v929
      %v931 = vpop.f32.mrf.mxu0
      %v932 = vadd.f32 0.0, %v931
      %933 = vmatmul.bf16.gmra.mxu0 %v705
      %v934 = vpop.f32.mrf.mxu0
      %v935 = vadd.f32 0.0, %v934
      %v936 = vpop.f32.mrf.mxu0
      %v937 = vadd.f32 0.0, %v936
      %938 = vmatmul.bf16.gmra.mxu0 %v708
      %v939 = vpop.f32.mrf.mxu0
      %v940 = vadd.f32 0.0, %v939
      %v941 = vpop.f32.mrf.mxu0
      %v942 = vadd.f32 0.0, %v941
      %943 = vmatmul.bf16.gmra.mxu0 %v711
      %v944 = vpop.f32.mrf.mxu0
      %v945 = vadd.f32 0.0, %v944
      %v946 = vpop.f32.mrf.mxu0
      %v947 = vadd.f32 0.0, %v946
      %948 = vmatmul.bf16.gmra.mxu0 %v714
      %v949 = vpop.f32.mrf.mxu0
      %v950 = vadd.f32 0.0, %v949
      %v951 = vpop.f32.mrf.mxu0
      %v952 = vadd.f32 0.0, %v951
      %953 = vmatmul.bf16.gmra.mxu0 %v717
      %v954 = vpop.f32.mrf.mxu0
      %v955 = vadd.f32 0.0, %v954
      %v956 = vpop.f32.mrf.mxu0
      %v957 = vadd.f32 0.0, %v956
      %958 = vmatmul.bf16.gmra.mxu0 %v720
      %v959 = vpop.f32.mrf.mxu0
      %v960 = vadd.f32 0.0, %v959
      %v961 = vpop.f32.mrf.mxu0
      %v962 = vadd.f32 0.0, %v961
      %963 = vmatmul.bf16.gmra.mxu0 %v723
      %v964 = vpop.f32.mrf.mxu0
      %v965 = vadd.f32 0.0, %v964
      %v966 = vpop.f32.mrf.mxu0
      %v967 = vadd.f32 0.0, %v966
      %968 = vmatmul.bf16.gmra.mxu0 %v726
      %v969 = vpop.f32.mrf.mxu0
      %v970 = vadd.f32 0.0, %v969
      %v971 = vpop.f32.mrf.mxu0
      %v972 = vadd.f32 0.0, %v971
      %973 = vmatmul.bf16.gmra.mxu0 %v729
      %v974 = vpop.f32.mrf.mxu0
      %v975 = vadd.f32 0.0, %v974
      %v976 = vpop.f32.mrf.mxu0
      %v977 = vadd.f32 0.0, %v976
      %978 = vmatmul.bf16.gmra.mxu0 %v732
      %v979 = vpop.f32.mrf.mxu0
      %v980 = vadd.f32 0.0, %v979
      %v981 = vpop.f32.mrf.mxu0
      %v982 = vadd.f32 0.0, %v981
      %983 = vmatmul.bf16.gmra.mxu0 %v735
      %v984 = vpop.f32.mrf.mxu0
      %v985 = vadd.f32 0.0, %v984
      %v986 = vpop.f32.mrf.mxu0
      %v987 = vadd.f32 0.0, %v986
      %988 = vmatmul.bf16.gmra.mxu0 %v738
      %v989 = vpop.f32.mrf.mxu0
      %v990 = vadd.f32 0.0, %v989
      %v991 = vpop.f32.mrf.mxu0
      %v992 = vadd.f32 0.0, %v991
      %993 = vmatmul.bf16.gmra.mxu0 %v741
      %v994 = vpop.f32.mrf.mxu0
      %v995 = vadd.f32 0.0, %v994
      %v996 = vpop.f32.mrf.mxu0
      %v997 = vadd.f32 0.0, %v996
      %998 = vmatmul.bf16.gmra.mxu0 %v744
      %v999 = vpop.f32.mrf.mxu0
      %v1000 = vadd.f32 0.0, %v999
      %v1001 = vpop.f32.mrf.mxu0
      %v1002 = vadd.f32 0.0, %v1001
      %1003 = vmatmul.bf16.gmra.mxu0 %v747
      %v1004 = vpop.f32.mrf.mxu0
      %v1005 = vadd.f32 0.0, %v1004
      %v1006 = vpop.f32.mrf.mxu0
      %v1007 = vadd.f32 0.0, %v1006
      %1008 = vmatmul.bf16.gmra.mxu0 %v750
      %v1009 = vpop.f32.mrf.mxu0
      %v1010 = vadd.f32 0.0, %v1009
      %v1011 = vpop.f32.mrf.mxu0
      %v1012 = vadd.f32 0.0, %v1011
      %1013 = vmatmul.bf16.gmra.mxu0 %v753
      %v1014 = vpop.f32.mrf.mxu0
      %v1015 = vadd.f32 0.0, %v1014
      %v1016 = vpop.f32.mrf.mxu0
      %v1017 = vadd.f32 0.0, %v1016
      %1018 = vmatmul.bf16.gmra.mxu0 %v756
      %v1019 = vpop.f32.mrf.mxu0
      %v1020 = vadd.f32 0.0, %v1019
      %v1021 = vpop.f32.mrf.mxu0
      %v1022 = vadd.f32 0.0, %v1021
      %1023 = vmatmul.bf16.gmra.mxu0 %v759
      %v1024 = vpop.f32.mrf.mxu0
      %v1025 = vadd.f32 0.0, %v1024
      %v1026 = vpop.f32.mrf.mxu0
      %v1027 = vadd.f32 0.0, %v1026
      %1028 = vmatmul.bf16.gmra.mxu0 %v762
      %v1029 = vpop.f32.mrf.mxu0
      %v1030 = vadd.f32 0.0, %v1029
      %v1031 = vpop.f32.mrf.mxu0
      %v1032 = vadd.f32 0.0, %v1031
      %1033 = vmatmul.bf16.gmra.mxu0 %v765
      %v1034 = vpop.f32.mrf.mxu0
      %v1035 = vadd.f32 0.0, %v1034
      %v1036 = vpop.f32.mrf.mxu0
      %v1037 = vadd.f32 0.0, %v1036
      %1038 = vmatmul.bf16.gmra.mxu0 %v768
      %v1039 = vpop.f32.mrf.mxu0
      %v1040 = vadd.f32 0.0, %v1039
      %v1041 = vpop.f32.mrf.mxu0
      %v1042 = vadd.f32 0.0, %v1041
      %1043 = vmatmul.bf16.gmra.mxu0 %v771
      %v1044 = vpop.f32.mrf.mxu0
      %v1045 = vadd.f32 0.0, %v1044
      %v1046 = vpop.f32.mrf.mxu0
      %v1047 = vadd.f32 0.0, %v1046
      %1048 = vmatmul.bf16.gmra.mxu0 %v774
      %v1049 = vpop.f32.mrf.mxu0
      %v1050 = vadd.f32 0.0, %v1049
      %v1051 = vpop.f32.mrf.mxu0
      %v1052 = vadd.f32 0.0, %v1051
      %1053 = vmatmul.bf16.gmra.mxu0 %v777
      %v1054 = vpop.f32.mrf.mxu0
      %v1055 = vadd.f32 0.0, %v1054
      %v1056 = vpop.f32.mrf.mxu0
      %v1057 = vadd.f32 0.0, %v1056
      %1058 = vmatmul.bf16.gmra.mxu0 %v780
      %v1059 = vpop.f32.mrf.mxu0
      %v1060 = vadd.f32 0.0, %v1059
      %v1061 = vpop.f32.mrf.mxu0
      %v1062 = vadd.f32 0.0, %v1061
      %1063 = vmatmul.bf16.gmra.mxu0 %v783
      %v1064 = vpop.f32.mrf.mxu0
      %v1065 = vadd.f32 0.0, %v1064
      %v1066 = vpop.f32.mrf.mxu0
      %v1067 = vadd.f32 0.0, %v1066
      %1068 = vmatmul.bf16.gmra.mxu0 %v786
      %v1069 = vpop.f32.mrf.mxu0
      %v1070 = vadd.f32 0.0, %v1069
      %v1071 = vpop.f32.mrf.mxu0
      %v1072 = vadd.f32 0.0, %v1071
      %1073 = vmatmul.bf16.gmra.mxu0 %v789
      %v1074 = vpop.f32.mrf.mxu0
      %v1075 = vadd.f32 0.0, %v1074
      %v1076 = vpop.f32.mrf.mxu0
      %v1077 = vadd.f32 0.0, %v1076
      %1078 = vmatmul.bf16.gmra.mxu0 %v792
      %v1079 = vpop.f32.mrf.mxu0
      %v1080 = vadd.f32 0.0, %v1079
      %v1081 = vpop.f32.mrf.mxu0
      %v1082 = vadd.f32 0.0, %v1081
      %1083 = vmatmul.bf16.gmra.mxu0 %v795
      %v1084 = vpop.f32.mrf.mxu0
      %v1085 = vadd.f32 0.0, %v1084
      %v1086 = vpop.f32.mrf.mxu0
      %v1087 = vadd.f32 0.0, %v1086
      %1088 = vmatmul.bf16.gmra.mxu0 %v798
      %v1089 = vpop.f32.mrf.mxu0
      %v1090 = vadd.f32 0.0, %v1089
      %v1091 = vpop.f32.mrf.mxu0
      %v1092 = vadd.f32 0.0, %v1091
      %1093 = vmatmul.bf16.gmra.mxu0 %v801
      %v1094 = vpop.f32.mrf.mxu0
      %v1095 = vadd.f32 0.0, %v1094
      %v1096 = vpop.f32.mrf.mxu0
      %v1097 = vadd.f32 0.0, %v1096
      %1098 = vmatmul.bf16.gmra.mxu0 %v804
      %v1099 = vpop.f32.mrf.mxu0
      %v1100 = vadd.f32 0.0, %v1099
      %v1101 = vpop.f32.mrf.mxu0
      %v1102 = vadd.f32 0.0, %v1101
      %1103 = vmatmul.bf16.gmra.mxu0 %v807
      %v1104 = vpop.f32.mrf.mxu0
      %v1105 = vadd.f32 0.0, %v1104
      %v1106 = vpop.f32.mrf.mxu0
      %v1107 = vadd.f32 0.0, %v1106
      %1108 = vmatmul.bf16.gmra.mxu0 %v810
      %v1109 = vpop.f32.mrf.mxu0
      %v1110 = vadd.f32 0.0, %v1109
      %v1111 = vpop.f32.mrf.mxu0
      %v1112 = vadd.f32 0.0, %v1111
      %1113 = vmatmul.bf16.gmra.mxu0 %v813
      %v1114 = vpop.f32.mrf.mxu0
      %v1115 = vadd.f32 0.0, %v1114
      %v1116 = vpop.f32.mrf.mxu0
      %v1117 = vadd.f32 0.0, %v1116
      %1118 = vmatmul.bf16.gmra.mxu0 %v816
      %v1119 = vpop.f32.mrf.mxu0
      %v1120 = vadd.f32 0.0, %v1119
      %v1121 = vpop.f32.mrf.mxu0
      %v1122 = vadd.f32 0.0, %v1121
      %1123 = vmatmul.bf16.gmra.mxu0 %v819
      %v1124 = vpop.f32.mrf.mxu0
      %v1125 = vadd.f32 0.0, %v1124
      %v1126 = vpop.f32.mrf.mxu0
      %v1127 = vadd.f32 0.0, %v1126
      %1128 = vmatmul.bf16.gmra.mxu0 %v822
      %v1129 = vpop.f32.mrf.mxu0
      %v1130 = vadd.f32 0.0, %v1129
      %v1131 = vpop.f32.mrf.mxu0
      %v1132 = vadd.f32 0.0, %v1131
      %1133 = vmatmul.bf16.gmra.mxu0 %v825
      %v1134 = vpop.f32.mrf.mxu0
      %v1135 = vadd.f32 0.0, %v1134
      %v1136 = vpop.f32.mrf.mxu0
      %v1137 = vadd.f32 0.0, %v1136
      %1138 = vmatmul.bf16.gmra.mxu0 %v828
      %v1139 = vpop.f32.mrf.mxu0
      %v1140 = vadd.f32 0.0, %v1139
      %v1141 = vpop.f32.mrf.mxu0
      %v1142 = vadd.f32 0.0, %v1141
      %1143 = vmatmul.bf16.gmra.mxu0 %v831
      %v1144 = vpop.f32.mrf.mxu0
      %v1145 = vadd.f32 0.0, %v1144
      %v1146 = vpop.f32.mrf.mxu0
      %v1147 = vadd.f32 0.0, %v1146
      %1148 = vmatmul.bf16.gmra.mxu0 %v834
      %v1149 = vpop.f32.mrf.mxu0
      %v1150 = vadd.f32 0.0, %v1149
      %v1151 = vpop.f32.mrf.mxu0
      %v1152 = vadd.f32 0.0, %v1151
      %1153 = vmatmul.bf16.gmra.mxu0 %v837
      %v1154 = vpop.f32.mrf.mxu0
      %v1155 = vadd.f32 0.0, %v1154
      %v1156 = vpop.f32.mrf.mxu0
      %v1157 = vadd.f32 0.0, %v1156
      %1158 = vmatmul.bf16.gmra.mxu0 %v840
      %v1159 = vpop.f32.mrf.mxu0
      %v1160 = vadd.f32 0.0, %v1159
      %v1161 = vpop.f32.mrf.mxu0
      %v1162 = vadd.f32 0.0, %v1161
      %1163 = vmatmul.bf16.gmra.mxu0 %v843
      %v1164 = vpop.f32.mrf.mxu0
      %v1165 = vadd.f32 0.0, %v1164
      %v1166 = vpop.f32.mrf.mxu0
      %v1167 = vadd.f32 0.0, %v1166
      %1168 = vmatmul.bf16.gmra.mxu0 %v846
      %v1169 = vpop.f32.mrf.mxu0
      %v1170 = vadd.f32 0.0, %v1169
      %v1171 = vpop.f32.mrf.mxu0
      %v1172 = vadd.f32 0.0, %v1171
      %1173 = vmatmul.bf16.gmra.mxu0 %v849
      %v1174 = vpop.f32.mrf.mxu0
      %v1175 = vadd.f32 0.0, %v1174
      %v1176 = vpop.f32.mrf.mxu0
      %v1177 = vadd.f32 0.0, %v1176
      %1178 = vmatmul.bf16.gmra.mxu0 %v852
      %v1179 = vpop.f32.mrf.mxu0
      %v1180 = vadd.f32 0.0, %v1179
      %v1181 = vpop.f32.mrf.mxu0
      %v1182 = vadd.f32 0.0, %v1181
      %1183 = vmatmul.bf16.gmra.mxu0 %v855
      %v1184 = vpop.f32.mrf.mxu0
      %v1185 = vadd.f32 0.0, %v1184
      %v1186 = vpop.f32.mrf.mxu0
      %v1187 = vadd.f32 0.0, %v1186
      %1188 = vmatmul.bf16.gmra.mxu0 %v858
      %v1189 = vpop.f32.mrf.mxu0
      %v1190 = vadd.f32 0.0, %v1189
      %v1191 = vpop.f32.mrf.mxu0
      %v1192 = vadd.f32 0.0, %v1191
      %1193 = vmatmul.bf16.gmra.mxu0 %v861
      %v1194 = vpop.f32.mrf.mxu0
      %v1195 = vadd.f32 0.0, %v1194
      %v1196 = vpop.f32.mrf.mxu0
      %v1197 = vadd.f32 0.0, %v1196
      %1198 = vdwg.mxu0
      %v1199 = vmax.f32 %v880, 0.0
      %v1200 = vmax.f32 %v882, 0.0
      %v1201 = vmax.f32 %v885, 0.0
      %v1202 = vmax.f32 %v887, 0.0
      %v1203 = vmax.f32 %v890, 0.0
      %v1204 = vmax.f32 %v892, 0.0
      %v1205 = vmax.f32 %v895, 0.0
      %v1206 = vmax.f32 %v897, 0.0
      %v1207 = vmax.f32 %v900, 0.0
      %v1208 = vmax.f32 %v902, 0.0
      %v1209 = vmax.f32 %v905, 0.0
      %v1210 = vmax.f32 %v907, 0.0
      %v1211 = vmax.f32 %v910, 0.0
      %v1212 = vmax.f32 %v912, 0.0
      %v1213 = vmax.f32 %v915, 0.0
      %v1214 = vmax.f32 %v917, 0.0
      %v1215 = vmax.f32 %v920, 0.0
      %v1216 = vmax.f32 %v922, 0.0
      %v1217 = vmax.f32 %v925, 0.0
      %v1218 = vmax.f32 %v927, 0.0
      %v1219 = vmax.f32 %v930, 0.0
      %v1220 = vmax.f32 %v932, 0.0
      %v1221 = vmax.f32 %v935, 0.0
      %v1222 = vmax.f32 %v937, 0.0
      %v1223 = vmax.f32 %v940, 0.0
      %v1224 = vmax.f32 %v942, 0.0
      %v1225 = vmax.f32 %v945, 0.0
      %v1226 = vmax.f32 %v947, 0.0
      %v1227 = vmax.f32 %v950, 0.0
      %v1228 = vmax.f32 %v952, 0.0
      %v1229 = vmax.f32 %v955, 0.0
      %v1230 = vmax.f32 %v957, 0.0
      %v1231 = vmax.f32 %v960, 0.0
      %v1232 = vmax.f32 %v962, 0.0
      %v1233 = vmax.f32 %v965, 0.0
      %v1234 = vmax.f32 %v967, 0.0
      %v1235 = vmax.f32 %v970, 0.0
      %v1236 = vmax.f32 %v972, 0.0
      %v1237 = vmax.f32 %v975, 0.0
      %v1238 = vmax.f32 %v977, 0.0
      %v1239 = vmax.f32 %v980, 0.0
      %v1240 = vmax.f32 %v982, 0.0
      %v1241 = vmax.f32 %v985, 0.0
      %v1242 = vmax.f32 %v987, 0.0
      %v1243 = vmax.f32 %v990, 0.0
      %v1244 = vmax.f32 %v992, 0.0
      %v1245 = vmax.f32 %v995, 0.0
      %v1246 = vmax.f32 %v997, 0.0
      %v1247 = vmax.f32 %v1000, 0.0
      %v1248 = vmax.f32 %v1002, 0.0
      %v1249 = vmax.f32 %v1005, 0.0
      %v1250 = vmax.f32 %v1007, 0.0
      %v1251 = vmax.f32 %v1010, 0.0
      %v1252 = vmax.f32 %v1012, 0.0
      %v1253 = vmax.f32 %v1015, 0.0
      %v1254 = vmax.f32 %v1017, 0.0
      %v1255 = vmax.f32 %v1020, 0.0
      %v1256 = vmax.f32 %v1022, 0.0
      %v1257 = vmax.f32 %v1025, 0.0
      %v1258 = vmax.f32 %v1027, 0.0
      %v1259 = vmax.f32 %v1030, 0.0
      %v1260 = vmax.f32 %v1032, 0.0
      %v1261 = vmax.f32 %v1035, 0.0
      %v1262 = vmax.f32 %v1037, 0.0
      %v1263 = vmax.f32 %v1040, 0.0
      %v1264 = vmax.f32 %v1042, 0.0
      %v1265 = vmax.f32 %v1045, 0.0
      %v1266 = vmax.f32 %v1047, 0.0
      %v1267 = vmax.f32 %v1050, 0.0
      %v1268 = vmax.f32 %v1052, 0.0
      %v1269 = vmax.f32 %v1055, 0.0
      %v1270 = vmax.f32 %v1057, 0.0
      %v1271 = vmax.f32 %v1060, 0.0
      %v1272 = vmax.f32 %v1062, 0.0
      %v1273 = vmax.f32 %v1065, 0.0
      %v1274 = vmax.f32 %v1067, 0.0
      %v1275 = vmax.f32 %v1070, 0.0
      %v1276 = vmax.f32 %v1072, 0.0
      %v1277 = vmax.f32 %v1075, 0.0
      %v1278 = vmax.f32 %v1077, 0.0
      %v1279 = vmax.f32 %v1080, 0.0
      %v1280 = vmax.f32 %v1082, 0.0
      %v1281 = vmax.f32 %v1085, 0.0
      %v1282 = vmax.f32 %v1087, 0.0
      %v1283 = vmax.f32 %v1090, 0.0
      %v1284 = vmax.f32 %v1092, 0.0
      %v1285 = vmax.f32 %v1095, 0.0
      %v1286 = vmax.f32 %v1097, 0.0
      %v1287 = vmax.f32 %v1100, 0.0
      %v1288 = vmax.f32 %v1102, 0.0
      %v1289 = vmax.f32 %v1105, 0.0
      %v1290 = vmax.f32 %v1107, 0.0
      %v1291 = vmax.f32 %v1110, 0.0
      %v1292 = vmax.f32 %v1112, 0.0
      %v1293 = vmax.f32 %v1115, 0.0
      %v1294 = vmax.f32 %v1117, 0.0
      %v1295 = vmax.f32 %v1120, 0.0
      %v1296 = vmax.f32 %v1122, 0.0
      %v1297 = vmax.f32 %v1125, 0.0
      %v1298 = vmax.f32 %v1127, 0.0
      %v1299 = vmax.f32 %v1130, 0.0
      %v1300 = vmax.f32 %v1132, 0.0
      %v1301 = vmax.f32 %v1135, 0.0
      %v1302 = vmax.f32 %v1137, 0.0
      %v1303 = vmax.f32 %v1140, 0.0
      %v1304 = vmax.f32 %v1142, 0.0
      %v1305 = vmax.f32 %v1145, 0.0
      %v1306 = vmax.f32 %v1147, 0.0
      %v1307 = vmax.f32 %v1150, 0.0
      %v1308 = vmax.f32 %v1152, 0.0
      %v1309 = vmax.f32 %v1155, 0.0
      %v1310 = vmax.f32 %v1157, 0.0
      %v1311 = vmax.f32 %v1160, 0.0
      %v1312 = vmax.f32 %v1162, 0.0
      %v1313 = vmax.f32 %v1165, 0.0
      %v1314 = vmax.f32 %v1167, 0.0
      %v1315 = vmax.f32 %v1170, 0.0
      %v1316 = vmax.f32 %v1172, 0.0
      %v1317 = vmax.f32 %v1175, 0.0
      %v1318 = vmax.f32 %v1177, 0.0
      %v1319 = vmax.f32 %v1180, 0.0
      %v1320 = vmax.f32 %v1182, 0.0
      %v1321 = vmax.f32 %v1185, 0.0
      %v1322 = vmax.f32 %v1187, 0.0
      %v1323 = vmax.f32 %v1190, 0.0
      %v1324 = vmax.f32 %v1192, 0.0
      %v1325 = vmax.f32 %v1195, 0.0
      %v1326 = vmax.f32 %v1197, 0.0
      %v1327 = vpack.c.bf16 %v1200, %v1199
      %v1328 = vpack.c.bf16 %v1202, %v1201
      %v1329 = vpack.c.bf16 %v1204, %v1203
      %v1330 = vpack.c.bf16 %v1206, %v1205
      %v1331 = vpack.c.bf16 %v1208, %v1207
      %v1332 = vpack.c.bf16 %v1210, %v1209
      %v1333 = vpack.c.bf16 %v1212, %v1211
      %v1334 = vpack.c.bf16 %v1214, %v1213
      %v1335 = vpack.c.bf16 %v1216, %v1215
      %v1336 = vpack.c.bf16 %v1218, %v1217
      %v1337 = vpack.c.bf16 %v1220, %v1219
      %v1338 = vpack.c.bf16 %v1222, %v1221
      %v1339 = vpack.c.bf16 %v1224, %v1223
      %v1340 = vpack.c.bf16 %v1226, %v1225
      %v1341 = vpack.c.bf16 %v1228, %v1227
      %v1342 = vpack.c.bf16 %v1230, %v1229
      %v1343 = vpack.c.bf16 %v1232, %v1231
      %v1344 = vpack.c.bf16 %v1234, %v1233
      %v1345 = vpack.c.bf16 %v1236, %v1235
      %v1346 = vpack.c.bf16 %v1238, %v1237
      %v1347 = vpack.c.bf16 %v1240, %v1239
      %v1348 = vpack.c.bf16 %v1242, %v1241
      %v1349 = vpack.c.bf16 %v1244, %v1243
      %v1350 = vpack.c.bf16 %v1246, %v1245
      %v1351 = vpack.c.bf16 %v1248, %v1247
      %v1352 = vpack.c.bf16 %v1250, %v1249
      %v1353 = vpack.c.bf16 %v1252, %v1251
      %v1354 = vpack.c.bf16 %v1254, %v1253
      %v1355 = vpack.c.bf16 %v1256, %v1255
      %v1356 = vpack.c.bf16 %v1258, %v1257
      %v1357 = vpack.c.bf16 %v1260, %v1259
      %v1358 = vpack.c.bf16 %v1262, %v1261
      %v1359 = vpack.c.bf16 %v1264, %v1263
      %v1360 = vpack.c.bf16 %v1266, %v1265
      %v1361 = vpack.c.bf16 %v1268, %v1267
      %v1362 = vpack.c.bf16 %v1270, %v1269
      %v1363 = vpack.c.bf16 %v1272, %v1271
      %v1364 = vpack.c.bf16 %v1274, %v1273
      %v1365 = vpack.c.bf16 %v1276, %v1275
      %v1366 = vpack.c.bf16 %v1278, %v1277
      %v1367 = vpack.c.bf16 %v1280, %v1279
      %v1368 = vpack.c.bf16 %v1282, %v1281
      %v1369 = vpack.c.bf16 %v1284, %v1283
      %v1370 = vpack.c.bf16 %v1286, %v1285
      %v1371 = vpack.c.bf16 %v1288, %v1287
      %v1372 = vpack.c.bf16 %v1290, %v1289
      %v1373 = vpack.c.bf16 %v1292, %v1291
      %v1374 = vpack.c.bf16 %v1294, %v1293
      %v1375 = vpack.c.bf16 %v1296, %v1295
      %v1376 = vpack.c.bf16 %v1298, %v1297
      %v1377 = vpack.c.bf16 %v1300, %v1299
      %v1378 = vpack.c.bf16 %v1302, %v1301
      %v1379 = vpack.c.bf16 %v1304, %v1303
      %v1380 = vpack.c.bf16 %v1306, %v1305
      %v1381 = vpack.c.bf16 %v1308, %v1307
      %v1382 = vpack.c.bf16 %v1310, %v1309
      %v1383 = vpack.c.bf16 %v1312, %v1311
      %v1384 = vpack.c.bf16 %v1314, %v1313
      %v1385 = vpack.c.bf16 %v1316, %v1315
      %v1386 = vpack.c.bf16 %v1318, %v1317
      %v1387 = vpack.c.bf16 %v1320, %v1319
      %v1388 = vpack.c.bf16 %v1322, %v1321
      %v1389 = vpack.c.bf16 %v1324, %v1323
      %v1390 = vpack.c.bf16 %v1326, %v1325
      %v1391 = vld [vmem:[%s2] sm:$0xf]
      %v1392 = vld [vmem:[%s2 + $0x4] sm:$0xf]
      %v1393 = vld [vmem:[%s2 + $0x8] sm:$0xf]
      %v1394 = vld [vmem:[%s2 + $0xc] sm:$0xf]
      %v1395 = vld [vmem:[%s3] sm:$0x1]
      %v1397 = vperm.slane %v1395, 0
      %v1403 = vunpack.c.l.b16 %v1391
      %v1404 = vunpack.c.l.b16 %v1392
      %v1405 = vunpack.c.l.b16 %v1393
      %v1406 = vunpack.c.l.b16 %v1394
      %v1407 = vpack.c.b16 %v1404, %v1403
      %v1408 = vpack.c.b16 %v1406, %v1405
      %vm1411 = vcmask 261120
      %v1413 = vsel %vm1411, %v1327, 0
      %v1416 = vsel %vm1411, %v1328, 0
      %v1419 = vsel %vm1411, %v1329, 0
      %v1422 = vsel %vm1411, %v1330, 0
      %v1425 = vsel %vm1411, %v1331, 0
      %v1428 = vsel %vm1411, %v1332, 0
      %v1431 = vsel %vm1411, %v1333, 0
      %v1434 = vsel %vm1411, %v1334, 0
      %v1437 = vsel %vm1411, %v1335, 0
      %v1440 = vsel %vm1411, %v1336, 0
      %v1443 = vsel %vm1411, %v1337, 0
      %v1446 = vsel %vm1411, %v1338, 0
      %v1449 = vsel %vm1411, %v1339, 0
      %v1452 = vsel %vm1411, %v1340, 0
      %v1455 = vsel %vm1411, %v1341, 0
      %v1458 = vsel %vm1411, %v1342, 0
      %v1461 = vsel %vm1411, %v1343, 0
      %v1464 = vsel %vm1411, %v1344, 0
      %v1467 = vsel %vm1411, %v1345, 0
      %v1470 = vsel %vm1411, %v1346, 0
      %v1473 = vsel %vm1411, %v1347, 0
      %v1476 = vsel %vm1411, %v1348, 0
      %v1479 = vsel %vm1411, %v1349, 0
      %v1482 = vsel %vm1411, %v1350, 0
      %v1485 = vsel %vm1411, %v1351, 0
      %v1488 = vsel %vm1411, %v1352, 0
      %v1491 = vsel %vm1411, %v1353, 0
      %v1494 = vsel %vm1411, %v1354, 0
      %v1497 = vsel %vm1411, %v1355, 0
      %v1500 = vsel %vm1411, %v1356, 0
      %v1503 = vsel %vm1411, %v1357, 0
      %v1506 = vsel %vm1411, %v1358, 0
      %v1509 = vsel %vm1411, %v1359, 0
      %v1512 = vsel %vm1411, %v1360, 0
      %v1515 = vsel %vm1411, %v1361, 0
      %v1518 = vsel %vm1411, %v1362, 0
      %v1521 = vsel %vm1411, %v1363, 0
      %v1524 = vsel %vm1411, %v1364, 0
      %v1527 = vsel %vm1411, %v1365, 0
      %v1530 = vsel %vm1411, %v1366, 0
      %v1533 = vsel %vm1411, %v1367, 0
      %v1536 = vsel %vm1411, %v1368, 0
      %v1539 = vsel %vm1411, %v1369, 0
      %v1542 = vsel %vm1411, %v1370, 0
      %v1545 = vsel %vm1411, %v1371, 0
      %v1548 = vsel %vm1411, %v1372, 0
      %v1551 = vsel %vm1411, %v1373, 0
      %v1554 = vsel %vm1411, %v1374, 0
      %v1557 = vsel %vm1411, %v1375, 0
      %v1560 = vsel %vm1411, %v1376, 0
      %v1563 = vsel %vm1411, %v1377, 0
      %v1566 = vsel %vm1411, %v1378, 0
      %v1569 = vsel %vm1411, %v1379, 0
      %v1572 = vsel %vm1411, %v1380, 0
      %v1575 = vsel %vm1411, %v1381, 0
      %v1578 = vsel %vm1411, %v1382, 0
      %v1581 = vsel %vm1411, %v1383, 0
      %v1584 = vsel %vm1411, %v1384, 0
      %v1587 = vsel %vm1411, %v1385, 0
      %v1590 = vsel %vm1411, %v1386, 0
      %v1593 = vsel %vm1411, %v1387, 0
      %v1596 = vsel %vm1411, %v1388, 0
      %v1599 = vsel %vm1411, %v1389, 0
      %v1602 = vsel %vm1411, %v1390, 0
      %1604 = vmatpush.bf16.msra.mxu0 0
      %1605 = vmatpush.bf16.msra.mxu0 0
      %1606 = vmatpush.bf16.msra.mxu0 0
      %1607 = vmatpush.bf16.msra.mxu0 0
      %1608 = vmatpush.bf16.msra.mxu0 0
      %1609 = vmatpush.bf16.msra.mxu0 0
      %1610 = vmatpush.bf16.msra.mxu0 %v1408
      %1611 = vmatpush.bf16.msra.mxu0 %v1407
      %1612 = vmatmul.bf16.gmra.mxu0 %v1413
      %v1613 = vpop.f32.mrf.mxu0
      %v1614 = vadd.f32 %v1397, %v1613
      %v1615 = vpop.f32.mrf.mxu0
      %v1616 = vadd.f32 %v1397, %v1615
      %1617 = vmatmul.bf16.gmra.mxu0 %v1416
      %v1618 = vpop.f32.mrf.mxu0
      %v1619 = vadd.f32 %v1397, %v1618
      %v1620 = vpop.f32.mrf.mxu0
      %v1621 = vadd.f32 %v1397, %v1620
      %1622 = vmatmul.bf16.gmra.mxu0 %v1419
      %v1623 = vpop.f32.mrf.mxu0
      %v1624 = vadd.f32 %v1397, %v1623
      %v1625 = vpop.f32.mrf.mxu0
      %v1626 = vadd.f32 %v1397, %v1625
      %1627 = vmatmul.bf16.gmra.mxu0 %v1422
      %v1628 = vpop.f32.mrf.mxu0
      %v1629 = vadd.f32 %v1397, %v1628
      %v1630 = vpop.f32.mrf.mxu0
      %v1631 = vadd.f32 %v1397, %v1630
      %1632 = vmatmul.bf16.gmra.mxu0 %v1425
      %v1633 = vpop.f32.mrf.mxu0
      %v1634 = vadd.f32 %v1397, %v1633
      %v1635 = vpop.f32.mrf.mxu0
      %v1636 = vadd.f32 %v1397, %v1635
      %1637 = vmatmul.bf16.gmra.mxu0 %v1428
      %v1638 = vpop.f32.mrf.mxu0
      %v1639 = vadd.f32 %v1397, %v1638
      %v1640 = vpop.f32.mrf.mxu0
      %v1641 = vadd.f32 %v1397, %v1640
      %1642 = vmatmul.bf16.gmra.mxu0 %v1431
      %v1643 = vpop.f32.mrf.mxu0
      %v1644 = vadd.f32 %v1397, %v1643
      %v1645 = vpop.f32.mrf.mxu0
      %v1646 = vadd.f32 %v1397, %v1645
      %1647 = vmatmul.bf16.gmra.mxu0 %v1434
      %v1648 = vpop.f32.mrf.mxu0
      %v1649 = vadd.f32 %v1397, %v1648
      %v1650 = vpop.f32.mrf.mxu0
      %v1651 = vadd.f32 %v1397, %v1650
      %1652 = vmatmul.bf16.gmra.mxu0 %v1437
      %v1653 = vpop.f32.mrf.mxu0
      %v1654 = vadd.f32 %v1397, %v1653
      %v1655 = vpop.f32.mrf.mxu0
      %v1656 = vadd.f32 %v1397, %v1655
      %1657 = vmatmul.bf16.gmra.mxu0 %v1440
      %v1658 = vpop.f32.mrf.mxu0
      %v1659 = vadd.f32 %v1397, %v1658
      %v1660 = vpop.f32.mrf.mxu0
      %v1661 = vadd.f32 %v1397, %v1660
      %1662 = vmatmul.bf16.gmra.mxu0 %v1443
      %v1663 = vpop.f32.mrf.mxu0
      %v1664 = vadd.f32 %v1397, %v1663
      %v1665 = vpop.f32.mrf.mxu0
      %v1666 = vadd.f32 %v1397, %v1665
      %1667 = vmatmul.bf16.gmra.mxu0 %v1446
      %v1668 = vpop.f32.mrf.mxu0
      %v1669 = vadd.f32 %v1397, %v1668
      %v1670 = vpop.f32.mrf.mxu0
      %v1671 = vadd.f32 %v1397, %v1670
      %1672 = vmatmul.bf16.gmra.mxu0 %v1449
      %v1673 = vpop.f32.mrf.mxu0
      %v1674 = vadd.f32 %v1397, %v1673
      %v1675 = vpop.f32.mrf.mxu0
      %v1676 = vadd.f32 %v1397, %v1675
      %1677 = vmatmul.bf16.gmra.mxu0 %v1452
      %v1678 = vpop.f32.mrf.mxu0
      %v1679 = vadd.f32 %v1397, %v1678
      %v1680 = vpop.f32.mrf.mxu0
      %v1681 = vadd.f32 %v1397, %v1680
      %1682 = vmatmul.bf16.gmra.mxu0 %v1455
      %v1683 = vpop.f32.mrf.mxu0
      %v1684 = vadd.f32 %v1397, %v1683
      %v1685 = vpop.f32.mrf.mxu0
      %v1686 = vadd.f32 %v1397, %v1685
      %1687 = vmatmul.bf16.gmra.mxu0 %v1458
      %v1688 = vpop.f32.mrf.mxu0
      %v1689 = vadd.f32 %v1397, %v1688
      %v1690 = vpop.f32.mrf.mxu0
      %v1691 = vadd.f32 %v1397, %v1690
      %1692 = vmatmul.bf16.gmra.mxu0 %v1461
      %v1693 = vpop.f32.mrf.mxu0
      %v1694 = vadd.f32 %v1397, %v1693
      %v1695 = vpop.f32.mrf.mxu0
      %v1696 = vadd.f32 %v1397, %v1695
      %1697 = vmatmul.bf16.gmra.mxu0 %v1464
      %v1698 = vpop.f32.mrf.mxu0
      %v1699 = vadd.f32 %v1397, %v1698
      %v1700 = vpop.f32.mrf.mxu0
      %v1701 = vadd.f32 %v1397, %v1700
      %1702 = vmatmul.bf16.gmra.mxu0 %v1467
      %v1703 = vpop.f32.mrf.mxu0
      %v1704 = vadd.f32 %v1397, %v1703
      %v1705 = vpop.f32.mrf.mxu0
      %v1706 = vadd.f32 %v1397, %v1705
      %1707 = vmatmul.bf16.gmra.mxu0 %v1470
      %v1708 = vpop.f32.mrf.mxu0
      %v1709 = vadd.f32 %v1397, %v1708
      %v1710 = vpop.f32.mrf.mxu0
      %v1711 = vadd.f32 %v1397, %v1710
      %1712 = vmatmul.bf16.gmra.mxu0 %v1473
      %v1713 = vpop.f32.mrf.mxu0
      %v1714 = vadd.f32 %v1397, %v1713
      %v1715 = vpop.f32.mrf.mxu0
      %v1716 = vadd.f32 %v1397, %v1715
      %1717 = vmatmul.bf16.gmra.mxu0 %v1476
      %v1718 = vpop.f32.mrf.mxu0
      %v1719 = vadd.f32 %v1397, %v1718
      %v1720 = vpop.f32.mrf.mxu0
      %v1721 = vadd.f32 %v1397, %v1720
      %1722 = vmatmul.bf16.gmra.mxu0 %v1479
      %v1723 = vpop.f32.mrf.mxu0
      %v1724 = vadd.f32 %v1397, %v1723
      %v1725 = vpop.f32.mrf.mxu0
      %v1726 = vadd.f32 %v1397, %v1725
      %1727 = vmatmul.bf16.gmra.mxu0 %v1482
      %v1728 = vpop.f32.mrf.mxu0
      %v1729 = vadd.f32 %v1397, %v1728
      %v1730 = vpop.f32.mrf.mxu0
      %v1731 = vadd.f32 %v1397, %v1730
      %1732 = vmatmul.bf16.gmra.mxu0 %v1485
      %v1733 = vpop.f32.mrf.mxu0
      %v1734 = vadd.f32 %v1397, %v1733
      %v1735 = vpop.f32.mrf.mxu0
      %v1736 = vadd.f32 %v1397, %v1735
      %1737 = vmatmul.bf16.gmra.mxu0 %v1488
      %v1738 = vpop.f32.mrf.mxu0
      %v1739 = vadd.f32 %v1397, %v1738
      %v1740 = vpop.f32.mrf.mxu0
      %v1741 = vadd.f32 %v1397, %v1740
      %1742 = vmatmul.bf16.gmra.mxu0 %v1491
      %v1743 = vpop.f32.mrf.mxu0
      %v1744 = vadd.f32 %v1397, %v1743
      %v1745 = vpop.f32.mrf.mxu0
      %v1746 = vadd.f32 %v1397, %v1745
      %1747 = vmatmul.bf16.gmra.mxu0 %v1494
      %v1748 = vpop.f32.mrf.mxu0
      %v1749 = vadd.f32 %v1397, %v1748
      %v1750 = vpop.f32.mrf.mxu0
      %v1751 = vadd.f32 %v1397, %v1750
      %1752 = vmatmul.bf16.gmra.mxu0 %v1497
      %v1753 = vpop.f32.mrf.mxu0
      %v1754 = vadd.f32 %v1397, %v1753
      %v1755 = vpop.f32.mrf.mxu0
      %v1756 = vadd.f32 %v1397, %v1755
      %1757 = vmatmul.bf16.gmra.mxu0 %v1500
      %v1758 = vpop.f32.mrf.mxu0
      %v1759 = vadd.f32 %v1397, %v1758
      %v1760 = vpop.f32.mrf.mxu0
      %v1761 = vadd.f32 %v1397, %v1760
      %1762 = vmatmul.bf16.gmra.mxu0 %v1503
      %v1763 = vpop.f32.mrf.mxu0
      %v1764 = vadd.f32 %v1397, %v1763
      %v1765 = vpop.f32.mrf.mxu0
      %v1766 = vadd.f32 %v1397, %v1765
      %1767 = vmatmul.bf16.gmra.mxu0 %v1506
      %v1768 = vpop.f32.mrf.mxu0
      %v1769 = vadd.f32 %v1397, %v1768
      %v1770 = vpop.f32.mrf.mxu0
      %v1771 = vadd.f32 %v1397, %v1770
      %1772 = vmatmul.bf16.gmra.mxu0 %v1509
      %v1773 = vpop.f32.mrf.mxu0
      %v1774 = vadd.f32 %v1397, %v1773
      %v1775 = vpop.f32.mrf.mxu0
      %v1776 = vadd.f32 %v1397, %v1775
      %1777 = vmatmul.bf16.gmra.mxu0 %v1512
      %v1778 = vpop.f32.mrf.mxu0
      %v1779 = vadd.f32 %v1397, %v1778
      %v1780 = vpop.f32.mrf.mxu0
      %v1781 = vadd.f32 %v1397, %v1780
      %1782 = vmatmul.bf16.gmra.mxu0 %v1515
      %v1783 = vpop.f32.mrf.mxu0
      %v1784 = vadd.f32 %v1397, %v1783
      %v1785 = vpop.f32.mrf.mxu0
      %v1786 = vadd.f32 %v1397, %v1785
      %1787 = vmatmul.bf16.gmra.mxu0 %v1518
      %v1788 = vpop.f32.mrf.mxu0
      %v1789 = vadd.f32 %v1397, %v1788
      %v1790 = vpop.f32.mrf.mxu0
      %v1791 = vadd.f32 %v1397, %v1790
      %1792 = vmatmul.bf16.gmra.mxu0 %v1521
      %v1793 = vpop.f32.mrf.mxu0
      %v1794 = vadd.f32 %v1397, %v1793
      %v1795 = vpop.f32.mrf.mxu0
      %v1796 = vadd.f32 %v1397, %v1795
      %1797 = vmatmul.bf16.gmra.mxu0 %v1524
      %v1798 = vpop.f32.mrf.mxu0
      %v1799 = vadd.f32 %v1397, %v1798
      %v1800 = vpop.f32.mrf.mxu0
      %v1801 = vadd.f32 %v1397, %v1800
      %1802 = vmatmul.bf16.gmra.mxu0 %v1527
      %v1803 = vpop.f32.mrf.mxu0
      %v1804 = vadd.f32 %v1397, %v1803
      %v1805 = vpop.f32.mrf.mxu0
      %v1806 = vadd.f32 %v1397, %v1805
      %1807 = vmatmul.bf16.gmra.mxu0 %v1530
      %v1808 = vpop.f32.mrf.mxu0
      %v1809 = vadd.f32 %v1397, %v1808
      %v1810 = vpop.f32.mrf.mxu0
      %v1811 = vadd.f32 %v1397, %v1810
      %1812 = vmatmul.bf16.gmra.mxu0 %v1533
      %v1813 = vpop.f32.mrf.mxu0
      %v1814 = vadd.f32 %v1397, %v1813
      %v1815 = vpop.f32.mrf.mxu0
      %v1816 = vadd.f32 %v1397, %v1815
      %1817 = vmatmul.bf16.gmra.mxu0 %v1536
      %v1818 = vpop.f32.mrf.mxu0
      %v1819 = vadd.f32 %v1397, %v1818
      %v1820 = vpop.f32.mrf.mxu0
      %v1821 = vadd.f32 %v1397, %v1820
      %1822 = vmatmul.bf16.gmra.mxu0 %v1539
      %v1823 = vpop.f32.mrf.mxu0
      %v1824 = vadd.f32 %v1397, %v1823
      %v1825 = vpop.f32.mrf.mxu0
      %v1826 = vadd.f32 %v1397, %v1825
      %1827 = vmatmul.bf16.gmra.mxu0 %v1542
      %v1828 = vpop.f32.mrf.mxu0
      %v1829 = vadd.f32 %v1397, %v1828
      %v1830 = vpop.f32.mrf.mxu0
      %v1831 = vadd.f32 %v1397, %v1830
      %1832 = vmatmul.bf16.gmra.mxu0 %v1545
      %v1833 = vpop.f32.mrf.mxu0
      %v1834 = vadd.f32 %v1397, %v1833
      %v1835 = vpop.f32.mrf.mxu0
      %v1836 = vadd.f32 %v1397, %v1835
      %1837 = vmatmul.bf16.gmra.mxu0 %v1548
      %v1838 = vpop.f32.mrf.mxu0
      %v1839 = vadd.f32 %v1397, %v1838
      %v1840 = vpop.f32.mrf.mxu0
      %v1841 = vadd.f32 %v1397, %v1840
      %1842 = vmatmul.bf16.gmra.mxu0 %v1551
      %v1843 = vpop.f32.mrf.mxu0
      %v1844 = vadd.f32 %v1397, %v1843
      %v1845 = vpop.f32.mrf.mxu0
      %v1846 = vadd.f32 %v1397, %v1845
      %1847 = vmatmul.bf16.gmra.mxu0 %v1554
      %v1848 = vpop.f32.mrf.mxu0
      %v1849 = vadd.f32 %v1397, %v1848
      %v1850 = vpop.f32.mrf.mxu0
      %v1851 = vadd.f32 %v1397, %v1850
      %1852 = vmatmul.bf16.gmra.mxu0 %v1557
      %v1853 = vpop.f32.mrf.mxu0
      %v1854 = vadd.f32 %v1397, %v1853
      %v1855 = vpop.f32.mrf.mxu0
      %v1856 = vadd.f32 %v1397, %v1855
      %1857 = vmatmul.bf16.gmra.mxu0 %v1560
      %v1858 = vpop.f32.mrf.mxu0
      %v1859 = vadd.f32 %v1397, %v1858
      %v1860 = vpop.f32.mrf.mxu0
      %v1861 = vadd.f32 %v1397, %v1860
      %1862 = vmatmul.bf16.gmra.mxu0 %v1563
      %v1863 = vpop.f32.mrf.mxu0
      %v1864 = vadd.f32 %v1397, %v1863
      %v1865 = vpop.f32.mrf.mxu0
      %v1866 = vadd.f32 %v1397, %v1865
      %1867 = vmatmul.bf16.gmra.mxu0 %v1566
      %v1868 = vpop.f32.mrf.mxu0
      %v1869 = vadd.f32 %v1397, %v1868
      %v1870 = vpop.f32.mrf.mxu0
      %v1871 = vadd.f32 %v1397, %v1870
      %1872 = vmatmul.bf16.gmra.mxu0 %v1569
      %v1873 = vpop.f32.mrf.mxu0
      %v1874 = vadd.f32 %v1397, %v1873
      %v1875 = vpop.f32.mrf.mxu0
      %v1876 = vadd.f32 %v1397, %v1875
      %1877 = vmatmul.bf16.gmra.mxu0 %v1572
      %v1878 = vpop.f32.mrf.mxu0
      %v1879 = vadd.f32 %v1397, %v1878
      %v1880 = vpop.f32.mrf.mxu0
      %v1881 = vadd.f32 %v1397, %v1880
      %1882 = vmatmul.bf16.gmra.mxu0 %v1575
      %v1883 = vpop.f32.mrf.mxu0
      %v1884 = vadd.f32 %v1397, %v1883
      %v1885 = vpop.f32.mrf.mxu0
      %v1886 = vadd.f32 %v1397, %v1885
      %1887 = vmatmul.bf16.gmra.mxu0 %v1578
      %v1888 = vpop.f32.mrf.mxu0
      %v1889 = vadd.f32 %v1397, %v1888
      %v1890 = vpop.f32.mrf.mxu0
      %v1891 = vadd.f32 %v1397, %v1890
      %1892 = vmatmul.bf16.gmra.mxu0 %v1581
      %v1893 = vpop.f32.mrf.mxu0
      %v1894 = vadd.f32 %v1397, %v1893
      %v1895 = vpop.f32.mrf.mxu0
      %v1896 = vadd.f32 %v1397, %v1895
      %1897 = vmatmul.bf16.gmra.mxu0 %v1584
      %v1898 = vpop.f32.mrf.mxu0
      %v1899 = vadd.f32 %v1397, %v1898
      %v1900 = vpop.f32.mrf.mxu0
      %v1901 = vadd.f32 %v1397, %v1900
      %1902 = vmatmul.bf16.gmra.mxu0 %v1587
      %v1903 = vpop.f32.mrf.mxu0
      %v1904 = vadd.f32 %v1397, %v1903
      %v1905 = vpop.f32.mrf.mxu0
      %v1906 = vadd.f32 %v1397, %v1905
      %1907 = vmatmul.bf16.gmra.mxu0 %v1590
      %v1908 = vpop.f32.mrf.mxu0
      %v1909 = vadd.f32 %v1397, %v1908
      %v1910 = vpop.f32.mrf.mxu0
      %v1911 = vadd.f32 %v1397, %v1910
      %1912 = vmatmul.bf16.gmra.mxu0 %v1593
      %v1913 = vpop.f32.mrf.mxu0
      %v1914 = vadd.f32 %v1397, %v1913
      %v1915 = vpop.f32.mrf.mxu0
      %v1916 = vadd.f32 %v1397, %v1915
      %1917 = vmatmul.bf16.gmra.mxu0 %v1596
      %v1918 = vpop.f32.mrf.mxu0
      %v1919 = vadd.f32 %v1397, %v1918
      %v1920 = vpop.f32.mrf.mxu0
      %v1921 = vadd.f32 %v1397, %v1920
      %1922 = vmatmul.bf16.gmra.mxu0 %v1599
      %v1923 = vpop.f32.mrf.mxu0
      %v1924 = vadd.f32 %v1397, %v1923
      %v1925 = vpop.f32.mrf.mxu0
      %v1926 = vadd.f32 %v1397, %v1925
      %1927 = vmatmul.bf16.gmra.mxu0 %v1602
      %v1928 = vpop.f32.mrf.mxu0
      %v1929 = vadd.f32 %v1397, %v1928
      %v1930 = vpop.f32.mrf.mxu0
      %v1931 = vadd.f32 %v1397, %v1930
      %1932 = vdwg.mxu0
      %v1933 = vmax.f32 %v1614, 0.0
      %v1934 = vmax.f32 %v1616, 0.0
      %v1935 = vmax.f32 %v1619, 0.0
      %v1936 = vmax.f32 %v1621, 0.0
      %v1937 = vmax.f32 %v1624, 0.0
      %v1938 = vmax.f32 %v1626, 0.0
      %v1939 = vmax.f32 %v1629, 0.0
      %v1940 = vmax.f32 %v1631, 0.0
      %v1941 = vmax.f32 %v1634, 0.0
      %v1942 = vmax.f32 %v1636, 0.0
      %v1943 = vmax.f32 %v1639, 0.0
      %v1944 = vmax.f32 %v1641, 0.0
      %v1945 = vmax.f32 %v1644, 0.0
      %v1946 = vmax.f32 %v1646, 0.0
      %v1947 = vmax.f32 %v1649, 0.0
      %v1948 = vmax.f32 %v1651, 0.0
      %v1949 = vmax.f32 %v1654, 0.0
      %v1950 = vmax.f32 %v1656, 0.0
      %v1951 = vmax.f32 %v1659, 0.0
      %v1952 = vmax.f32 %v1661, 0.0
      %v1953 = vmax.f32 %v1664, 0.0
      %v1954 = vmax.f32 %v1666, 0.0
      %v1955 = vmax.f32 %v1669, 0.0
      %v1956 = vmax.f32 %v1671, 0.0
      %v1957 = vmax.f32 %v1674, 0.0
      %v1958 = vmax.f32 %v1676, 0.0
      %v1959 = vmax.f32 %v1679, 0.0
      %v1960 = vmax.f32 %v1681, 0.0
      %v1961 = vmax.f32 %v1684, 0.0
      %v1962 = vmax.f32 %v1686, 0.0
      %v1963 = vmax.f32 %v1689, 0.0
      %v1964 = vmax.f32 %v1691, 0.0
      %v1965 = vmax.f32 %v1694, 0.0
      %v1966 = vmax.f32 %v1696, 0.0
      %v1967 = vmax.f32 %v1699, 0.0
      %v1968 = vmax.f32 %v1701, 0.0
      %v1969 = vmax.f32 %v1704, 0.0
      %v1970 = vmax.f32 %v1706, 0.0
      %v1971 = vmax.f32 %v1709, 0.0
      %v1972 = vmax.f32 %v1711, 0.0
      %v1973 = vmax.f32 %v1714, 0.0
      %v1974 = vmax.f32 %v1716, 0.0
      %v1975 = vmax.f32 %v1719, 0.0
      %v1976 = vmax.f32 %v1721, 0.0
      %v1977 = vmax.f32 %v1724, 0.0
      %v1978 = vmax.f32 %v1726, 0.0
      %v1979 = vmax.f32 %v1729, 0.0
      %v1980 = vmax.f32 %v1731, 0.0
      %v1981 = vmax.f32 %v1734, 0.0
      %v1982 = vmax.f32 %v1736, 0.0
      %v1983 = vmax.f32 %v1739, 0.0
      %v1984 = vmax.f32 %v1741, 0.0
      %v1985 = vmax.f32 %v1744, 0.0
      %v1986 = vmax.f32 %v1746, 0.0
      %v1987 = vmax.f32 %v1749, 0.0
      %v1988 = vmax.f32 %v1751, 0.0
      %v1989 = vmax.f32 %v1754, 0.0
      %v1990 = vmax.f32 %v1756, 0.0
      %v1991 = vmax.f32 %v1759, 0.0
      %v1992 = vmax.f32 %v1761, 0.0
      %v1993 = vmax.f32 %v1764, 0.0
      %v1994 = vmax.f32 %v1766, 0.0
      %v1995 = vmax.f32 %v1769, 0.0
      %v1996 = vmax.f32 %v1771, 0.0
      %v1997 = vmax.f32 %v1774, 0.0
      %v1998 = vmax.f32 %v1776, 0.0
      %v1999 = vmax.f32 %v1779, 0.0
      %v2000 = vmax.f32 %v1781, 0.0
      %v2001 = vmax.f32 %v1784, 0.0
      %v2002 = vmax.f32 %v1786, 0.0
      %v2003 = vmax.f32 %v1789, 0.0
      %v2004 = vmax.f32 %v1791, 0.0
      %v2005 = vmax.f32 %v1794, 0.0
      %v2006 = vmax.f32 %v1796, 0.0
      %v2007 = vmax.f32 %v1799, 0.0
      %v2008 = vmax.f32 %v1801, 0.0
      %v2009 = vmax.f32 %v1804, 0.0
      %v2010 = vmax.f32 %v1806, 0.0
      %v2011 = vmax.f32 %v1809, 0.0
      %v2012 = vmax.f32 %v1811, 0.0
      %v2013 = vmax.f32 %v1814, 0.0
      %v2014 = vmax.f32 %v1816, 0.0
      %v2015 = vmax.f32 %v1819, 0.0
      %v2016 = vmax.f32 %v1821, 0.0
      %v2017 = vmax.f32 %v1824, 0.0
      %v2018 = vmax.f32 %v1826, 0.0
      %v2019 = vmax.f32 %v1829, 0.0
      %v2020 = vmax.f32 %v1831, 0.0
      %v2021 = vmax.f32 %v1834, 0.0
      %v2022 = vmax.f32 %v1836, 0.0
      %v2023 = vmax.f32 %v1839, 0.0
      %v2024 = vmax.f32 %v1841, 0.0
      %v2025 = vmax.f32 %v1844, 0.0
      %v2026 = vmax.f32 %v1846, 0.0
      %v2027 = vmax.f32 %v1849, 0.0
      %v2028 = vmax.f32 %v1851, 0.0
      %v2029 = vmax.f32 %v1854, 0.0
      %v2030 = vmax.f32 %v1856, 0.0
      %v2031 = vmax.f32 %v1859, 0.0
      %v2032 = vmax.f32 %v1861, 0.0
      %v2033 = vmax.f32 %v1864, 0.0
      %v2034 = vmax.f32 %v1866, 0.0
      %v2035 = vmax.f32 %v1869, 0.0
      %v2036 = vmax.f32 %v1871, 0.0
      %v2037 = vmax.f32 %v1874, 0.0
      %v2038 = vmax.f32 %v1876, 0.0
      %v2039 = vmax.f32 %v1879, 0.0
      %v2040 = vmax.f32 %v1881, 0.0
      %v2041 = vmax.f32 %v1884, 0.0
      %v2042 = vmax.f32 %v1886, 0.0
      %v2043 = vmax.f32 %v1889, 0.0
      %v2044 = vmax.f32 %v1891, 0.0
      %v2045 = vmax.f32 %v1894, 0.0
      %v2046 = vmax.f32 %v1896, 0.0
      %v2047 = vmax.f32 %v1899, 0.0
      %v2048 = vmax.f32 %v1901, 0.0
      %v2049 = vmax.f32 %v1904, 0.0
      %v2050 = vmax.f32 %v1906, 0.0
      %v2051 = vmax.f32 %v1909, 0.0
      %v2052 = vmax.f32 %v1911, 0.0
      %v2053 = vmax.f32 %v1914, 0.0
      %v2054 = vmax.f32 %v1916, 0.0
      %v2055 = vmax.f32 %v1919, 0.0
      %v2056 = vmax.f32 %v1921, 0.0
      %v2057 = vmax.f32 %v1924, 0.0
      %v2058 = vmax.f32 %v1926, 0.0
      %v2059 = vmax.f32 %v1929, 0.0
      %v2060 = vmax.f32 %v1931, 0.0
      %vm2061 = vcmask 523264
      %v2062 = vsel %vm2061, %v1933, -inf
      %v2063 = vsel %vm2061, %v1934, -inf
      %v2064 = vmax.f32 %v2062, %v2063
      %v2065 = vrot.slane %v2064, 4
      %v2066 = vmax.f32 %v2064, %v2065
      %v2067 = vrot.slane %v2066, 2
      %v2068 = vmax.f32 %v2066, %v2067
      %v2069 = vrot.slane %v2068, 1
      %v2070 = vmax.f32 %v2068, %v2069
      %v2071 = vsel %vm2061, %v1935, -inf
      %v2072 = vsel %vm2061, %v1936, -inf
      %v2073 = vmax.f32 %v2071, %v2072
      %v2074 = vrot.slane %v2073, 4
      %v2075 = vmax.f32 %v2073, %v2074
      %v2076 = vrot.slane %v2075, 2
      %v2077 = vmax.f32 %v2075, %v2076
      %v2078 = vrot.slane %v2077, 1
      %v2079 = vmax.f32 %v2077, %v2078
      %v2080 = vsel %vm2061, %v1937, -inf
      %v2081 = vsel %vm2061, %v1938, -inf
      %v2082 = vmax.f32 %v2080, %v2081
      %v2083 = vrot.slane %v2082, 4
      %v2084 = vmax.f32 %v2082, %v2083
      %v2085 = vrot.slane %v2084, 2
      %v2086 = vmax.f32 %v2084, %v2085
      %v2087 = vrot.slane %v2086, 1
      %v2088 = vmax.f32 %v2086, %v2087
      %v2089 = vsel %vm2061, %v1939, -inf
      %v2090 = vsel %vm2061, %v1940, -inf
      %v2091 = vmax.f32 %v2089, %v2090
      %v2092 = vrot.slane %v2091, 4
      %v2093 = vmax.f32 %v2091, %v2092
      %v2094 = vrot.slane %v2093, 2
      %v2095 = vmax.f32 %v2093, %v2094
      %v2096 = vrot.slane %v2095, 1
      %v2097 = vmax.f32 %v2095, %v2096
      %v2098 = vsel %vm2061, %v1941, -inf
      %v2099 = vsel %vm2061, %v1942, -inf
      %v2100 = vmax.f32 %v2098, %v2099
      %v2101 = vrot.slane %v2100, 4
      %v2102 = vmax.f32 %v2100, %v2101
      %v2103 = vrot.slane %v2102, 2
      %v2104 = vmax.f32 %v2102, %v2103
      %v2105 = vrot.slane %v2104, 1
      %v2106 = vmax.f32 %v2104, %v2105
      %v2107 = vsel %vm2061, %v1943, -inf
      %v2108 = vsel %vm2061, %v1944, -inf
      %v2109 = vmax.f32 %v2107, %v2108
      %v2110 = vrot.slane %v2109, 4
      %v2111 = vmax.f32 %v2109, %v2110
      %v2112 = vrot.slane %v2111, 2
      %v2113 = vmax.f32 %v2111, %v2112
      %v2114 = vrot.slane %v2113, 1
      %v2115 = vmax.f32 %v2113, %v2114
      %v2116 = vsel %vm2061, %v1945, -inf
      %v2117 = vsel %vm2061, %v1946, -inf
      %v2118 = vmax.f32 %v2116, %v2117
      %v2119 = vrot.slane %v2118, 4
      %v2120 = vmax.f32 %v2118, %v2119
      %v2121 = vrot.slane %v2120, 2
      %v2122 = vmax.f32 %v2120, %v2121
      %v2123 = vrot.slane %v2122, 1
      %v2124 = vmax.f32 %v2122, %v2123
      %v2125 = vsel %vm2061, %v1947, -inf
      %v2126 = vsel %vm2061, %v1948, -inf
      %v2127 = vmax.f32 %v2125, %v2126
      %v2128 = vrot.slane %v2127, 4
      %v2129 = vmax.f32 %v2127, %v2128
      %v2130 = vrot.slane %v2129, 2
      %v2131 = vmax.f32 %v2129, %v2130
      %v2132 = vrot.slane %v2131, 1
      %v2133 = vmax.f32 %v2131, %v2132
      %v2134 = vsel %vm2061, %v1949, -inf
      %v2135 = vsel %vm2061, %v1950, -inf
      %v2136 = vmax.f32 %v2134, %v2135
      %v2137 = vrot.slane %v2136, 4
      %v2138 = vmax.f32 %v2136, %v2137
      %v2139 = vrot.slane %v2138, 2
      %v2140 = vmax.f32 %v2138, %v2139
      %v2141 = vrot.slane %v2140, 1
      %v2142 = vmax.f32 %v2140, %v2141
      %v2143 = vsel %vm2061, %v1951, -inf
      %v2144 = vsel %vm2061, %v1952, -inf
      %v2145 = vmax.f32 %v2143, %v2144
      %v2146 = vrot.slane %v2145, 4
      %v2147 = vmax.f32 %v2145, %v2146
      %v2148 = vrot.slane %v2147, 2
      %v2149 = vmax.f32 %v2147, %v2148
      %v2150 = vrot.slane %v2149, 1
      %v2151 = vmax.f32 %v2149, %v2150
      %v2152 = vsel %vm2061, %v1953, -inf
      %v2153 = vsel %vm2061, %v1954, -inf
      %v2154 = vmax.f32 %v2152, %v2153
      %v2155 = vrot.slane %v2154, 4
      %v2156 = vmax.f32 %v2154, %v2155
      %v2157 = vrot.slane %v2156, 2
      %v2158 = vmax.f32 %v2156, %v2157
      %v2159 = vrot.slane %v2158, 1
      %v2160 = vmax.f32 %v2158, %v2159
      %v2161 = vsel %vm2061, %v1955, -inf
      %v2162 = vsel %vm2061, %v1956, -inf
      %v2163 = vmax.f32 %v2161, %v2162
      %v2164 = vrot.slane %v2163, 4
      %v2165 = vmax.f32 %v2163, %v2164
      %v2166 = vrot.slane %v2165, 2
      %v2167 = vmax.f32 %v2165, %v2166
      %v2168 = vrot.slane %v2167, 1
      %v2169 = vmax.f32 %v2167, %v2168
      %v2170 = vsel %vm2061, %v1957, -inf
      %v2171 = vsel %vm2061, %v1958, -inf
      %v2172 = vmax.f32 %v2170, %v2171
      %v2173 = vrot.slane %v2172, 4
      %v2174 = vmax.f32 %v2172, %v2173
      %v2175 = vrot.slane %v2174, 2
      %v2176 = vmax.f32 %v2174, %v2175
      %v2177 = vrot.slane %v2176, 1
      %v2178 = vmax.f32 %v2176, %v2177
      %v2179 = vsel %vm2061, %v1959, -inf
      %v2180 = vsel %vm2061, %v1960, -inf
      %v2181 = vmax.f32 %v2179, %v2180
      %v2182 = vrot.slane %v2181, 4
      %v2183 = vmax.f32 %v2181, %v2182
      %v2184 = vrot.slane %v2183, 2
      %v2185 = vmax.f32 %v2183, %v2184
      %v2186 = vrot.slane %v2185, 1
      %v2187 = vmax.f32 %v2185, %v2186
      %v2188 = vsel %vm2061, %v1961, -inf
      %v2189 = vsel %vm2061, %v1962, -inf
      %v2190 = vmax.f32 %v2188, %v2189
      %v2191 = vrot.slane %v2190, 4
      %v2192 = vmax.f32 %v2190, %v2191
      %v2193 = vrot.slane %v2192, 2
      %v2194 = vmax.f32 %v2192, %v2193
      %v2195 = vrot.slane %v2194, 1
      %v2196 = vmax.f32 %v2194, %v2195
      %v2197 = vsel %vm2061, %v1963, -inf
      %v2198 = vsel %vm2061, %v1964, -inf
      %v2199 = vmax.f32 %v2197, %v2198
      %v2200 = vrot.slane %v2199, 4
      %v2201 = vmax.f32 %v2199, %v2200
      %v2202 = vrot.slane %v2201, 2
      %v2203 = vmax.f32 %v2201, %v2202
      %v2204 = vrot.slane %v2203, 1
      %v2205 = vmax.f32 %v2203, %v2204
      %v2206 = vsel %vm2061, %v1965, -inf
      %v2207 = vsel %vm2061, %v1966, -inf
      %v2208 = vmax.f32 %v2206, %v2207
      %v2209 = vrot.slane %v2208, 4
      %v2210 = vmax.f32 %v2208, %v2209
      %v2211 = vrot.slane %v2210, 2
      %v2212 = vmax.f32 %v2210, %v2211
      %v2213 = vrot.slane %v2212, 1
      %v2214 = vmax.f32 %v2212, %v2213
      %v2215 = vsel %vm2061, %v1967, -inf
      %v2216 = vsel %vm2061, %v1968, -inf
      %v2217 = vmax.f32 %v2215, %v2216
      %v2218 = vrot.slane %v2217, 4
      %v2219 = vmax.f32 %v2217, %v2218
      %v2220 = vrot.slane %v2219, 2
      %v2221 = vmax.f32 %v2219, %v2220
      %v2222 = vrot.slane %v2221, 1
      %v2223 = vmax.f32 %v2221, %v2222
      %v2224 = vsel %vm2061, %v1969, -inf
      %v2225 = vsel %vm2061, %v1970, -inf
      %v2226 = vmax.f32 %v2224, %v2225
      %v2227 = vrot.slane %v2226, 4
      %v2228 = vmax.f32 %v2226, %v2227
      %v2229 = vrot.slane %v2228, 2
      %v2230 = vmax.f32 %v2228, %v2229
      %v2231 = vrot.slane %v2230, 1
      %v2232 = vmax.f32 %v2230, %v2231
      %v2233 = vsel %vm2061, %v1971, -inf
      %v2234 = vsel %vm2061, %v1972, -inf
      %v2235 = vmax.f32 %v2233, %v2234
      %v2236 = vrot.slane %v2235, 4
      %v2237 = vmax.f32 %v2235, %v2236
      %v2238 = vrot.slane %v2237, 2
      %v2239 = vmax.f32 %v2237, %v2238
      %v2240 = vrot.slane %v2239, 1
      %v2241 = vmax.f32 %v2239, %v2240
      %v2242 = vsel %vm2061, %v1973, -inf
      %v2243 = vsel %vm2061, %v1974, -inf
      %v2244 = vmax.f32 %v2242, %v2243
      %v2245 = vrot.slane %v2244, 4
      %v2246 = vmax.f32 %v2244, %v2245
      %v2247 = vrot.slane %v2246, 2
      %v2248 = vmax.f32 %v2246, %v2247
      %v2249 = vrot.slane %v2248, 1
      %v2250 = vmax.f32 %v2248, %v2249
      %v2251 = vsel %vm2061, %v1975, -inf
      %v2252 = vsel %vm2061, %v1976, -inf
      %v2253 = vmax.f32 %v2251, %v2252
      %v2254 = vrot.slane %v2253, 4
      %v2255 = vmax.f32 %v2253, %v2254
      %v2256 = vrot.slane %v2255, 2
      %v2257 = vmax.f32 %v2255, %v2256
      %v2258 = vrot.slane %v2257, 1
      %v2259 = vmax.f32 %v2257, %v2258
      %v2260 = vsel %vm2061, %v1977, -inf
      %v2261 = vsel %vm2061, %v1978, -inf
      %v2262 = vmax.f32 %v2260, %v2261
      %v2263 = vrot.slane %v2262, 4
      %v2264 = vmax.f32 %v2262, %v2263
      %v2265 = vrot.slane %v2264, 2
      %v2266 = vmax.f32 %v2264, %v2265
      %v2267 = vrot.slane %v2266, 1
      %v2268 = vmax.f32 %v2266, %v2267
      %v2269 = vsel %vm2061, %v1979, -inf
      %v2270 = vsel %vm2061, %v1980, -inf
      %v2271 = vmax.f32 %v2269, %v2270
      %v2272 = vrot.slane %v2271, 4
      %v2273 = vmax.f32 %v2271, %v2272
      %v2274 = vrot.slane %v2273, 2
      %v2275 = vmax.f32 %v2273, %v2274
      %v2276 = vrot.slane %v2275, 1
      %v2277 = vmax.f32 %v2275, %v2276
      %v2278 = vsel %vm2061, %v1981, -inf
      %v2279 = vsel %vm2061, %v1982, -inf
      %v2280 = vmax.f32 %v2278, %v2279
      %v2281 = vrot.slane %v2280, 4
      %v2282 = vmax.f32 %v2280, %v2281
      %v2283 = vrot.slane %v2282, 2
      %v2284 = vmax.f32 %v2282, %v2283
      %v2285 = vrot.slane %v2284, 1
      %v2286 = vmax.f32 %v2284, %v2285
      %v2287 = vsel %vm2061, %v1983, -inf
      %v2288 = vsel %vm2061, %v1984, -inf
      %v2289 = vmax.f32 %v2287, %v2288
      %v2290 = vrot.slane %v2289, 4
      %v2291 = vmax.f32 %v2289, %v2290
      %v2292 = vrot.slane %v2291, 2
      %v2293 = vmax.f32 %v2291, %v2292
      %v2294 = vrot.slane %v2293, 1
      %v2295 = vmax.f32 %v2293, %v2294
      %v2296 = vsel %vm2061, %v1985, -inf
      %v2297 = vsel %vm2061, %v1986, -inf
      %v2298 = vmax.f32 %v2296, %v2297
      %v2299 = vrot.slane %v2298, 4
      %v2300 = vmax.f32 %v2298, %v2299
      %v2301 = vrot.slane %v2300, 2
      %v2302 = vmax.f32 %v2300, %v2301
      %v2303 = vrot.slane %v2302, 1
      %v2304 = vmax.f32 %v2302, %v2303
      %v2305 = vsel %vm2061, %v1987, -inf
      %v2306 = vsel %vm2061, %v1988, -inf
      %v2307 = vmax.f32 %v2305, %v2306
      %v2308 = vrot.slane %v2307, 4
      %v2309 = vmax.f32 %v2307, %v2308
      %v2310 = vrot.slane %v2309, 2
      %v2311 = vmax.f32 %v2309, %v2310
      %v2312 = vrot.slane %v2311, 1
      %v2313 = vmax.f32 %v2311, %v2312
      %v2314 = vsel %vm2061, %v1989, -inf
      %v2315 = vsel %vm2061, %v1990, -inf
      %v2316 = vmax.f32 %v2314, %v2315
      %v2317 = vrot.slane %v2316, 4
      %v2318 = vmax.f32 %v2316, %v2317
      %v2319 = vrot.slane %v2318, 2
      %v2320 = vmax.f32 %v2318, %v2319
      %v2321 = vrot.slane %v2320, 1
      %v2322 = vmax.f32 %v2320, %v2321
      %v2323 = vsel %vm2061, %v1991, -inf
      %v2324 = vsel %vm2061, %v1992, -inf
      %v2325 = vmax.f32 %v2323, %v2324
      %v2326 = vrot.slane %v2325, 4
      %v2327 = vmax.f32 %v2325, %v2326
      %v2328 = vrot.slane %v2327, 2
      %v2329 = vmax.f32 %v2327, %v2328
      %v2330 = vrot.slane %v2329, 1
      %v2331 = vmax.f32 %v2329, %v2330
      %v2332 = vsel %vm2061, %v1993, -inf
      %v2333 = vsel %vm2061, %v1994, -inf
      %v2334 = vmax.f32 %v2332, %v2333
      %v2335 = vrot.slane %v2334, 4
      %v2336 = vmax.f32 %v2334, %v2335
      %v2337 = vrot.slane %v2336, 2
      %v2338 = vmax.f32 %v2336, %v2337
      %v2339 = vrot.slane %v2338, 1
      %v2340 = vmax.f32 %v2338, %v2339
      %v2341 = vsel %vm2061, %v1995, -inf
      %v2342 = vsel %vm2061, %v1996, -inf
      %v2343 = vmax.f32 %v2341, %v2342
      %v2344 = vrot.slane %v2343, 4
      %v2345 = vmax.f32 %v2343, %v2344
      %v2346 = vrot.slane %v2345, 2
      %v2347 = vmax.f32 %v2345, %v2346
      %v2348 = vrot.slane %v2347, 1
      %v2349 = vmax.f32 %v2347, %v2348
      %v2350 = vsel %vm2061, %v1997, -inf
      %v2351 = vsel %vm2061, %v1998, -inf
      %v2352 = vmax.f32 %v2350, %v2351
      %v2353 = vrot.slane %v2352, 4
      %v2354 = vmax.f32 %v2352, %v2353
      %v2355 = vrot.slane %v2354, 2
      %v2356 = vmax.f32 %v2354, %v2355
      %v2357 = vrot.slane %v2356, 1
      %v2358 = vmax.f32 %v2356, %v2357
      %v2359 = vsel %vm2061, %v1999, -inf
      %v2360 = vsel %vm2061, %v2000, -inf
      %v2361 = vmax.f32 %v2359, %v2360
      %v2362 = vrot.slane %v2361, 4
      %v2363 = vmax.f32 %v2361, %v2362
      %v2364 = vrot.slane %v2363, 2
      %v2365 = vmax.f32 %v2363, %v2364
      %v2366 = vrot.slane %v2365, 1
      %v2367 = vmax.f32 %v2365, %v2366
      %v2368 = vsel %vm2061, %v2001, -inf
      %v2369 = vsel %vm2061, %v2002, -inf
      %v2370 = vmax.f32 %v2368, %v2369
      %v2371 = vrot.slane %v2370, 4
      %v2372 = vmax.f32 %v2370, %v2371
      %v2373 = vrot.slane %v2372, 2
      %v2374 = vmax.f32 %v2372, %v2373
      %v2375 = vrot.slane %v2374, 1
      %v2376 = vmax.f32 %v2374, %v2375
      %v2377 = vsel %vm2061, %v2003, -inf
      %v2378 = vsel %vm2061, %v2004, -inf
      %v2379 = vmax.f32 %v2377, %v2378
      %v2380 = vrot.slane %v2379, 4
      %v2381 = vmax.f32 %v2379, %v2380
      %v2382 = vrot.slane %v2381, 2
      %v2383 = vmax.f32 %v2381, %v2382
      %v2384 = vrot.slane %v2383, 1
      %v2385 = vmax.f32 %v2383, %v2384
      %v2386 = vsel %vm2061, %v2005, -inf
      %v2387 = vsel %vm2061, %v2006, -inf
      %v2388 = vmax.f32 %v2386, %v2387
      %v2389 = vrot.slane %v2388, 4
      %v2390 = vmax.f32 %v2388, %v2389
      %v2391 = vrot.slane %v2390, 2
      %v2392 = vmax.f32 %v2390, %v2391
      %v2393 = vrot.slane %v2392, 1
      %v2394 = vmax.f32 %v2392, %v2393
      %v2395 = vsel %vm2061, %v2007, -inf
      %v2396 = vsel %vm2061, %v2008, -inf
      %v2397 = vmax.f32 %v2395, %v2396
      %v2398 = vrot.slane %v2397, 4
      %v2399 = vmax.f32 %v2397, %v2398
      %v2400 = vrot.slane %v2399, 2
      %v2401 = vmax.f32 %v2399, %v2400
      %v2402 = vrot.slane %v2401, 1
      %v2403 = vmax.f32 %v2401, %v2402
      %v2404 = vsel %vm2061, %v2009, -inf
      %v2405 = vsel %vm2061, %v2010, -inf
      %v2406 = vmax.f32 %v2404, %v2405
      %v2407 = vrot.slane %v2406, 4
      %v2408 = vmax.f32 %v2406, %v2407
      %v2409 = vrot.slane %v2408, 2
      %v2410 = vmax.f32 %v2408, %v2409
      %v2411 = vrot.slane %v2410, 1
      %v2412 = vmax.f32 %v2410, %v2411
      %v2413 = vsel %vm2061, %v2011, -inf
      %v2414 = vsel %vm2061, %v2012, -inf
      %v2415 = vmax.f32 %v2413, %v2414
      %v2416 = vrot.slane %v2415, 4
      %v2417 = vmax.f32 %v2415, %v2416
      %v2418 = vrot.slane %v2417, 2
      %v2419 = vmax.f32 %v2417, %v2418
      %v2420 = vrot.slane %v2419, 1
      %v2421 = vmax.f32 %v2419, %v2420
      %v2422 = vsel %vm2061, %v2013, -inf
      %v2423 = vsel %vm2061, %v2014, -inf
      %v2424 = vmax.f32 %v2422, %v2423
      %v2425 = vrot.slane %v2424, 4
      %v2426 = vmax.f32 %v2424, %v2425
      %v2427 = vrot.slane %v2426, 2
      %v2428 = vmax.f32 %v2426, %v2427
      %v2429 = vrot.slane %v2428, 1
      %v2430 = vmax.f32 %v2428, %v2429
      %v2431 = vsel %vm2061, %v2015, -inf
      %v2432 = vsel %vm2061, %v2016, -inf
      %v2433 = vmax.f32 %v2431, %v2432
      %v2434 = vrot.slane %v2433, 4
      %v2435 = vmax.f32 %v2433, %v2434
      %v2436 = vrot.slane %v2435, 2
      %v2437 = vmax.f32 %v2435, %v2436
      %v2438 = vrot.slane %v2437, 1
      %v2439 = vmax.f32 %v2437, %v2438
      %v2440 = vsel %vm2061, %v2017, -inf
      %v2441 = vsel %vm2061, %v2018, -inf
      %v2442 = vmax.f32 %v2440, %v2441
      %v2443 = vrot.slane %v2442, 4
      %v2444 = vmax.f32 %v2442, %v2443
      %v2445 = vrot.slane %v2444, 2
      %v2446 = vmax.f32 %v2444, %v2445
      %v2447 = vrot.slane %v2446, 1
      %v2448 = vmax.f32 %v2446, %v2447
      %v2449 = vsel %vm2061, %v2019, -inf
      %v2450 = vsel %vm2061, %v2020, -inf
      %v2451 = vmax.f32 %v2449, %v2450
      %v2452 = vrot.slane %v2451, 4
      %v2453 = vmax.f32 %v2451, %v2452
      %v2454 = vrot.slane %v2453, 2
      %v2455 = vmax.f32 %v2453, %v2454
      %v2456 = vrot.slane %v2455, 1
      %v2457 = vmax.f32 %v2455, %v2456
      %v2458 = vsel %vm2061, %v2021, -inf
      %v2459 = vsel %vm2061, %v2022, -inf
      %v2460 = vmax.f32 %v2458, %v2459
      %v2461 = vrot.slane %v2460, 4
      %v2462 = vmax.f32 %v2460, %v2461
      %v2463 = vrot.slane %v2462, 2
      %v2464 = vmax.f32 %v2462, %v2463
      %v2465 = vrot.slane %v2464, 1
      %v2466 = vmax.f32 %v2464, %v2465
      %v2467 = vsel %vm2061, %v2023, -inf
      %v2468 = vsel %vm2061, %v2024, -inf
      %v2469 = vmax.f32 %v2467, %v2468
      %v2470 = vrot.slane %v2469, 4
      %v2471 = vmax.f32 %v2469, %v2470
      %v2472 = vrot.slane %v2471, 2
      %v2473 = vmax.f32 %v2471, %v2472
      %v2474 = vrot.slane %v2473, 1
      %v2475 = vmax.f32 %v2473, %v2474
      %v2476 = vsel %vm2061, %v2025, -inf
      %v2477 = vsel %vm2061, %v2026, -inf
      %v2478 = vmax.f32 %v2476, %v2477
      %v2479 = vrot.slane %v2478, 4
      %v2480 = vmax.f32 %v2478, %v2479
      %v2481 = vrot.slane %v2480, 2
      %v2482 = vmax.f32 %v2480, %v2481
      %v2483 = vrot.slane %v2482, 1
      %v2484 = vmax.f32 %v2482, %v2483
      %v2485 = vsel %vm2061, %v2027, -inf
      %v2486 = vsel %vm2061, %v2028, -inf
      %v2487 = vmax.f32 %v2485, %v2486
      %v2488 = vrot.slane %v2487, 4
      %v2489 = vmax.f32 %v2487, %v2488
      %v2490 = vrot.slane %v2489, 2
      %v2491 = vmax.f32 %v2489, %v2490
      %v2492 = vrot.slane %v2491, 1
      %v2493 = vmax.f32 %v2491, %v2492
      %v2494 = vsel %vm2061, %v2029, -inf
      %v2495 = vsel %vm2061, %v2030, -inf
      %v2496 = vmax.f32 %v2494, %v2495
      %v2497 = vrot.slane %v2496, 4
      %v2498 = vmax.f32 %v2496, %v2497
      %v2499 = vrot.slane %v2498, 2
      %v2500 = vmax.f32 %v2498, %v2499
      %v2501 = vrot.slane %v2500, 1
      %v2502 = vmax.f32 %v2500, %v2501
      %v2503 = vsel %vm2061, %v2031, -inf
      %v2504 = vsel %vm2061, %v2032, -inf
      %v2505 = vmax.f32 %v2503, %v2504
      %v2506 = vrot.slane %v2505, 4
      %v2507 = vmax.f32 %v2505, %v2506
      %v2508 = vrot.slane %v2507, 2
      %v2509 = vmax.f32 %v2507, %v2508
      %v2510 = vrot.slane %v2509, 1
      %v2511 = vmax.f32 %v2509, %v2510
      %v2512 = vsel %vm2061, %v2033, -inf
      %v2513 = vsel %vm2061, %v2034, -inf
      %v2514 = vmax.f32 %v2512, %v2513
      %v2515 = vrot.slane %v2514, 4
      %v2516 = vmax.f32 %v2514, %v2515
      %v2517 = vrot.slane %v2516, 2
      %v2518 = vmax.f32 %v2516, %v2517
      %v2519 = vrot.slane %v2518, 1
      %v2520 = vmax.f32 %v2518, %v2519
      %v2521 = vsel %vm2061, %v2035, -inf
      %v2522 = vsel %vm2061, %v2036, -inf
      %v2523 = vmax.f32 %v2521, %v2522
      %v2524 = vrot.slane %v2523, 4
      %v2525 = vmax.f32 %v2523, %v2524
      %v2526 = vrot.slane %v2525, 2
      %v2527 = vmax.f32 %v2525, %v2526
      %v2528 = vrot.slane %v2527, 1
      %v2529 = vmax.f32 %v2527, %v2528
      %v2530 = vsel %vm2061, %v2037, -inf
      %v2531 = vsel %vm2061, %v2038, -inf
      %v2532 = vmax.f32 %v2530, %v2531
      %v2533 = vrot.slane %v2532, 4
      %v2534 = vmax.f32 %v2532, %v2533
      %v2535 = vrot.slane %v2534, 2
      %v2536 = vmax.f32 %v2534, %v2535
      %v2537 = vrot.slane %v2536, 1
      %v2538 = vmax.f32 %v2536, %v2537
      %v2539 = vsel %vm2061, %v2039, -inf
      %v2540 = vsel %vm2061, %v2040, -inf
      %v2541 = vmax.f32 %v2539, %v2540
      %v2542 = vrot.slane %v2541, 4
      %v2543 = vmax.f32 %v2541, %v2542
      %v2544 = vrot.slane %v2543, 2
      %v2545 = vmax.f32 %v2543, %v2544
      %v2546 = vrot.slane %v2545, 1
      %v2547 = vmax.f32 %v2545, %v2546
      %v2548 = vsel %vm2061, %v2041, -inf
      %v2549 = vsel %vm2061, %v2042, -inf
      %v2550 = vmax.f32 %v2548, %v2549
      %v2551 = vrot.slane %v2550, 4
      %v2552 = vmax.f32 %v2550, %v2551
      %v2553 = vrot.slane %v2552, 2
      %v2554 = vmax.f32 %v2552, %v2553
      %v2555 = vrot.slane %v2554, 1
      %v2556 = vmax.f32 %v2554, %v2555
      %v2557 = vsel %vm2061, %v2043, -inf
      %v2558 = vsel %vm2061, %v2044, -inf
      %v2559 = vmax.f32 %v2557, %v2558
      %v2560 = vrot.slane %v2559, 4
      %v2561 = vmax.f32 %v2559, %v2560
      %v2562 = vrot.slane %v2561, 2
      %v2563 = vmax.f32 %v2561, %v2562
      %v2564 = vrot.slane %v2563, 1
      %v2565 = vmax.f32 %v2563, %v2564
      %v2566 = vsel %vm2061, %v2045, -inf
      %v2567 = vsel %vm2061, %v2046, -inf
      %v2568 = vmax.f32 %v2566, %v2567
      %v2569 = vrot.slane %v2568, 4
      %v2570 = vmax.f32 %v2568, %v2569
      %v2571 = vrot.slane %v2570, 2
      %v2572 = vmax.f32 %v2570, %v2571
      %v2573 = vrot.slane %v2572, 1
      %v2574 = vmax.f32 %v2572, %v2573
      %v2575 = vsel %vm2061, %v2047, -inf
      %v2576 = vsel %vm2061, %v2048, -inf
      %v2577 = vmax.f32 %v2575, %v2576
      %v2578 = vrot.slane %v2577, 4
      %v2579 = vmax.f32 %v2577, %v2578
      %v2580 = vrot.slane %v2579, 2
      %v2581 = vmax.f32 %v2579, %v2580
      %v2582 = vrot.slane %v2581, 1
      %v2583 = vmax.f32 %v2581, %v2582
      %v2584 = vsel %vm2061, %v2049, -inf
      %v2585 = vsel %vm2061, %v2050, -inf
      %v2586 = vmax.f32 %v2584, %v2585
      %v2587 = vrot.slane %v2586, 4
      %v2588 = vmax.f32 %v2586, %v2587
      %v2589 = vrot.slane %v2588, 2
      %v2590 = vmax.f32 %v2588, %v2589
      %v2591 = vrot.slane %v2590, 1
      %v2592 = vmax.f32 %v2590, %v2591
      %v2593 = vsel %vm2061, %v2051, -inf
      %v2594 = vsel %vm2061, %v2052, -inf
      %v2595 = vmax.f32 %v2593, %v2594
      %v2596 = vrot.slane %v2595, 4
      %v2597 = vmax.f32 %v2595, %v2596
      %v2598 = vrot.slane %v2597, 2
      %v2599 = vmax.f32 %v2597, %v2598
      %v2600 = vrot.slane %v2599, 1
      %v2601 = vmax.f32 %v2599, %v2600
      %v2602 = vsel %vm2061, %v2053, -inf
      %v2603 = vsel %vm2061, %v2054, -inf
      %v2604 = vmax.f32 %v2602, %v2603
      %v2605 = vrot.slane %v2604, 4
      %v2606 = vmax.f32 %v2604, %v2605
      %v2607 = vrot.slane %v2606, 2
      %v2608 = vmax.f32 %v2606, %v2607
      %v2609 = vrot.slane %v2608, 1
      %v2610 = vmax.f32 %v2608, %v2609
      %v2611 = vsel %vm2061, %v2055, -inf
      %v2612 = vsel %vm2061, %v2056, -inf
      %v2613 = vmax.f32 %v2611, %v2612
      %v2614 = vrot.slane %v2613, 4
      %v2615 = vmax.f32 %v2613, %v2614
      %v2616 = vrot.slane %v2615, 2
      %v2617 = vmax.f32 %v2615, %v2616
      %v2618 = vrot.slane %v2617, 1
      %v2619 = vmax.f32 %v2617, %v2618
      %v2620 = vsel %vm2061, %v2057, -inf
      %v2621 = vsel %vm2061, %v2058, -inf
      %v2622 = vmax.f32 %v2620, %v2621
      %v2623 = vrot.slane %v2622, 4
      %v2624 = vmax.f32 %v2622, %v2623
      %v2625 = vrot.slane %v2624, 2
      %v2626 = vmax.f32 %v2624, %v2625
      %v2627 = vrot.slane %v2626, 1
      %v2628 = vmax.f32 %v2626, %v2627
      %v2629 = vsel %vm2061, %v2059, -inf
      %v2630 = vsel %vm2061, %v2060, -inf
      %v2631 = vmax.f32 %v2629, %v2630
      %v2632 = vrot.slane %v2631, 4
      %v2633 = vmax.f32 %v2631, %v2632
      %v2634 = vrot.slane %v2633, 2
      %v2635 = vmax.f32 %v2633, %v2634
      %v2636 = vrot.slane %v2635, 1
      %v2637 = vmax.f32 %v2635, %v2636
      %vm2702 = vcmask 1041409
      %v2703 = vsel %vm2702, %v2079, %v2070
      %vm2704 = vcmask 1042434
      %v2705 = vsel %vm2704, %v2088, %v2703
      %vm2706 = vcmask 1043459
      %v2707 = vsel %vm2706, %v2097, %v2705
      %vm2708 = vcmask 1044484
      %v2709 = vsel %vm2708, %v2106, %v2707
      %vm2710 = vcmask 1045509
      %v2711 = vsel %vm2710, %v2115, %v2709
      %vm2712 = vcmask 1046534
      %v2713 = vsel %vm2712, %v2124, %v2711
      %vm2714 = vcmask 1047559
      %v2715 = vsel %vm2714, %v2133, %v2713
      %v2716 = vsel %vm2702, %v2151, %v2142
      %v2717 = vsel %vm2704, %v2160, %v2716
      %v2718 = vsel %vm2706, %v2169, %v2717
      %v2719 = vsel %vm2708, %v2178, %v2718
      %v2720 = vsel %vm2710, %v2187, %v2719
      %v2721 = vsel %vm2712, %v2196, %v2720
      %v2722 = vsel %vm2714, %v2205, %v2721
      %v2723 = vsel %vm2702, %v2223, %v2214
      %v2724 = vsel %vm2704, %v2232, %v2723
      %v2725 = vsel %vm2706, %v2241, %v2724
      %v2726 = vsel %vm2708, %v2250, %v2725
      %v2727 = vsel %vm2710, %v2259, %v2726
      %v2728 = vsel %vm2712, %v2268, %v2727
      %v2729 = vsel %vm2714, %v2277, %v2728
      %v2730 = vsel %vm2702, %v2295, %v2286
      %v2731 = vsel %vm2704, %v2304, %v2730
      %v2732 = vsel %vm2706, %v2313, %v2731
      %v2733 = vsel %vm2708, %v2322, %v2732
      %v2734 = vsel %vm2710, %v2331, %v2733
      %v2735 = vsel %vm2712, %v2340, %v2734
      %v2736 = vsel %vm2714, %v2349, %v2735
      %v2737 = vsel %vm2702, %v2367, %v2358
      %v2738 = vsel %vm2704, %v2376, %v2737
      %v2739 = vsel %vm2706, %v2385, %v2738
      %v2740 = vsel %vm2708, %v2394, %v2739
      %v2741 = vsel %vm2710, %v2403, %v2740
      %v2742 = vsel %vm2712, %v2412, %v2741
      %v2743 = vsel %vm2714, %v2421, %v2742
      %v2744 = vsel %vm2702, %v2439, %v2430
      %v2745 = vsel %vm2704, %v2448, %v2744
      %v2746 = vsel %vm2706, %v2457, %v2745
      %v2747 = vsel %vm2708, %v2466, %v2746
      %v2748 = vsel %vm2710, %v2475, %v2747
      %v2749 = vsel %vm2712, %v2484, %v2748
      %v2750 = vsel %vm2714, %v2493, %v2749
      %v2751 = vsel %vm2702, %v2511, %v2502
      %v2752 = vsel %vm2704, %v2520, %v2751
      %v2753 = vsel %vm2706, %v2529, %v2752
      %v2754 = vsel %vm2708, %v2538, %v2753
      %v2755 = vsel %vm2710, %v2547, %v2754
      %v2756 = vsel %vm2712, %v2556, %v2755
      %v2757 = vsel %vm2714, %v2565, %v2756
      %v2758 = vsel %vm2702, %v2583, %v2574
      %v2759 = vsel %vm2704, %v2592, %v2758
      %v2760 = vsel %vm2706, %v2601, %v2759
      %v2761 = vsel %vm2708, %v2610, %v2760
      %v2762 = vsel %vm2710, %v2619, %v2761
      %v2763 = vsel %vm2712, %v2628, %v2762
      %v2764 = vsel %vm2714, %v2637, %v2763
      %2773 = vst.msk [vmem:[%s199] sm:$0xff] %vm2061, %v2715
      %2774 = vst.msk [vmem:[%s199 + $0x8] sm:$0xff] %vm2061, %v2722
      %2775 = vst.msk [vmem:[%s199 + $0x10] sm:$0xff] %vm2061, %v2729
      %2776 = vst.msk [vmem:[%s199 + $0x18] sm:$0xff] %vm2061, %v2736
      %2777 = vst.msk [vmem:[%s199 + $0x20] sm:$0xff] %vm2061, %v2743
      %2778 = vst.msk [vmem:[%s199 + $0x28] sm:$0xff] %vm2061, %v2750
      %2779 = vst.msk [vmem:[%s199 + $0x30] sm:$0xff] %vm2061, %v2757
      %2780 = vst.msk [vmem:[%s199 + $0x38] sm:$0xff] %vm2061, %v2764
      %s2781 = smul.u32 8, %s15
      %p2782 = scmp.lt.s32.totalorder %s2781, 15
      %s2783 = scalar_select %p2782, %s2781, 15
      %s2784 = smul.addr %s2783, 8
      %s2785 = scalar_lea.vmem %s4, %s2784
      // Predicated region
      $region37: #{tpu_custom_call.1} parent=35 // pred_check
        %p2786 = pneg %p122
      $region38: #{tpu_custom_call.1} parent=35 // pred_check_branch
        %2788 = sbr.rel (%p2786) target = $region40
      $region39: #{tpu_custom_call.1} parent=35 // pred_region
        %s2789 = smul.u32 8, %s15
      $region40: #{tpu_custom_call.1} parent=35 // pred_fallthru
        _
    $region36: #{tpu_custom_call.1} parent=5 // pred_fallthru
      _
    %p2790 = scmp.le.s32.totalorder 2, %s10
    // Predicated region
    $region41: #{tpu_custom_call.1} parent=5 // pred_check
      %p2791 = pneg %p2790
    $region42: #{tpu_custom_call.1} parent=5 // pred_check_branch
      %2793 = sbr.rel (%p2791) target = $region44
    $region43: #{tpu_custom_call.1} parent=5 // pred_region
      %s2794 = ssub.s32 %s10, 2
      // Predicated region
      $region45: #{tpu_custom_call.1} parent=43 // pred_check
        %p2795 = pneg %p128
      $region46: #{tpu_custom_call.1} parent=43 // pred_check_branch
        %2797 = sbr.rel (%p2795) target = $region48
      $region47: #{tpu_custom_call.1} parent=43 // pred_region
        %s2798 = smul.u32 8, %s16
        %p2799 = scmp.lt.s32.totalorder %s2798, 15
        %s2800 = scalar_select %p2799, %s2798, 15
        %s2801 = smul.addr %s2800, 8
        %s2802 = scalar_lea.vmem %s4, %s2801
      $region48: #{tpu_custom_call.1} parent=43 // pred_fallthru
        _
    $region44: #{tpu_custom_call.1} parent=5 // pred_fallthru
      _
  $region6: #{tpu_custom_call.1} parent=0 // loop_footer
    %s14 = sadd.s32 1, %s10
  $region7: #{tpu_custom_call.1} parent=0 // loop_footer_branch
    %9 = sbr.rel target = $region3
  $region8: #{tpu_custom_call.1} parent=0 // loop_exit
    _

</llo_original>
